<compile_context>
chip_gen: v7x
topology: tpu7x:2x2x1
jax: 0.10.0
libtpu: 0.0.40
codegen_flags: <defaults>
</compile_context>

<pallas_src>
import jax
import jax.numpy as jnp
from jax import lax
from jax.experimental import pallas as pl
from jax.experimental.pallas import tpu as pltpu

# ----------------------------- model dimensions ------------------------------
INPUT_DIM = 20
NUM_AGENTS = 8
OBS_HID, OBS_OUT = 32, 32          # encoder.obs_encoder
SCHED_GAT_OUT = 16                 # scheduler GAT out_features (pair dim = 32)
SCHED_MLP_HID = 32                 # scheduler MLP hidden
PROC_OUT = 24                      # processor GAT out_features
DEC_HID, DEC_OUT = 32, 16          # decoder MLP

# ------------------- packed parameter slab layout (f32, (176, 64)) -----------
# Every weight sits at an 8-aligned row offset so static slices fall on
# (8,128) sublane-tile boundaries.
_R_ENC_W1 = 0      # rows 0:20,   cols 0:32   Linear(20,32)   (rows 20:24 zero pad)
_R_ENC_W2 = 24     # rows 24:56,  cols 0:32   Linear(32,32)
_R_GAT_W = 56      # rows 56:88,  cols 0:40   [sched_gat_w | proc_gat_w]
_R_SMLP_W1 = 88    # rows 88:104, cols 0:64   [pairMLP W1_top | W1_bot]
_R_DEC_W1 = 104    # rows 104:128, cols 0:32  Linear(24,32)
_R_DEC_W2 = 128    # rows 128:160, cols 0:16  Linear(32,16)
_R_VEC = 160       # rows 160:176, cols 0:32  packed small vector params
SLAB_ROWS = 176
SLAB_COLS = 64

# rows of the small-vector block (relative to _R_VEC); hot bias rows in tile 0
_V_ENC_B1 = 0      # cols 0:OBS_HID
_V_ENC_B2 = 1      # cols 0:OBS_OUT
_V_SMLP_B1 = 2     # cols 0:SCHED_MLP_HID
_V_DEC_B1 = 3      # cols 0:DEC_HID
_V_DEC_B2 = 4      # cols 0:DEC_OUT
_V_SGAT_ASRC = 5   # cols 0:SCHED_GAT_OUT
_V_SGAT_ADST = 6   # cols 0:SCHED_GAT_OUT
_V_SMLP_W2D = 7    # cols 0:SCHED_MLP_HID  (w2[:,1] - w2[:,0])
_V_SMLP_B2D = 8    # col 0                 (b2[1] - b2[0])
_V_PGAT_ASRC = 9   # cols 0:PROC_OUT
_V_PGAT_ADST = 10  # cols 0:PROC_OUT
VEC_ROWS = 16


# --------------------------------- kernel -------------------------------------
def magic_fused_kernel(x_ref, noise_ref, slab_ref, out_ref):
    f32 = jnp.float32
    n = noise_ref.shape[0]
    x = x_ref[0]                                          # (n, INPUT_DIM)  torch: X.squeeze(0)
    vec = slab_ref[_R_VEC:_R_VEC + VEC_ROWS, 0:32]        # (16, 32) packed small params

    # ---- Encoder.obs_encoder: Linear(20,32) -> ReLU -> Linear(32,32) ----
    h = (jnp.dot(x, slab_ref[_R_ENC_W1:_R_ENC_W1 + INPUT_DIM, 0:OBS_HID],
                 preferred_element_type=f32)
         + vec[_V_ENC_B1:_V_ENC_B1 + 1, 0:OBS_HID])
    h = jnp.maximum(h, 0.0)
    comm = (jnp.dot(h, slab_ref[_R_ENC_W2:_R_ENC_W2 + OBS_HID, 0:OBS_OUT],
                    preferred_element_type=f32)
            + vec[_V_ENC_B2:_V_ENC_B2 + 1, 0:OBS_OUT])

    # ---- fused GAT projections (same LHS): comm @ [sched_W | proc_W] ----
    hgp = jnp.dot(comm,
                  slab_ref[_R_GAT_W:_R_GAT_W + OBS_OUT, 0:SCHED_GAT_OUT + PROC_OUT],
                  preferred_element_type=f32)             # (n, 40)
    hg = hgp[:, 0:SCHED_GAT_OUT]                          # (n, 16) scheduler GAT
    hp = hgp[:, SCHED_GAT_OUT:SCHED_GAT_OUT + PROC_OUT]   # (n, 24) processor GAT

    # ---- SubScheduler GAT on the complete graph (no mask needed) ----
    asrc = vec[_V_SGAT_ASRC:_V_SGAT_ASRC + 1, 0:SCHED_GAT_OUT]
    adst = vec[_V_SGAT_ADST:_V_SGAT_ADST + 1, 0:SCHED_GAT_OUT]
    src = jnp.sum(hg * asrc, axis=-1, keepdims=True)      # (n, 1)  VPU mul + lane reduce
    dst = lax.dot_general(adst, hg, (((1,), (1,)), ((), ())),
                          preferred_element_type=f32)     # (1, n)  keeps lane layout
    e = src + dst                                         # (n, n)
    e = jnp.where(e > 0.0, e, 0.2 * e)                    # LeakyReLU(0.2)
    e = e - jnp.max(e, axis=-1, keepdims=True)
    p = jnp.exp(e)
    attn = p / jnp.sum(p, axis=-1, keepdims=True)
    enc = jnp.dot(attn, hg, preferred_element_type=f32)   # (n, 16)

    # ---- SubScheduler pairwise MLP + hard gumbel-softmax (directed, class 1) ----
    # concat decomposition: [enc_i || enc_j] @ W1 = enc_i @ W1_top + enc_j @ W1_bot
    apbp = jnp.dot(enc,
                   slab_ref[_R_SMLP_W1:_R_SMLP_W1 + SCHED_GAT_OUT, 0:2 * SCHED_MLP_HID],
                   preferred_element_type=f32)            # (n, 64) fused ap|bp
    ap = apbp[:, 0:SCHED_MLP_HID] + vec[_V_SMLP_B1:_V_SMLP_B1 + 1, 0:SCHED_MLP_HID]
    bp = apbp[:, SCHED_MLP_HID:2 * SCHED_MLP_HID]
    r = jnp.maximum(ap[:, None, :] + bp[None, :, :], 0.0)  # (n, n, 32)
    # only (logit_1 - logit_0) matters for the hard decision
    w_diff = vec[_V_SMLP_W2D:_V_SMLP_W2D + 1, 0:SCHED_MLP_HID]   # (1, 32)
    b_diff = vec[_V_SMLP_B2D:_V_SMLP_B2D + 1, 0:1]               # (1, 1)
    dl = jnp.sum(r * w_diff, axis=-1) + b_diff                   # (n, n)
    # noise = g1 - g0 ~ Logistic(0,1); strict '>' resolves ties to class 0
    # (same as torch argmax -> lowest index).
    adj = ((dl + noise_ref[...]) > 0.0).astype(f32)              # (n, n) learned adjacency

    # ---- SubProcessor GAT with the learned adjacency (leak-safe masked softmax) ----
    psrc = vec[_V_PGAT_ASRC:_V_PGAT_ASRC + 1, 0:PROC_OUT]
    pdst = vec[_V_PGAT_ADST:_V_PGAT_ADST + 1, 0:PROC_OUT]
    src = jnp.sum(hp * psrc, axis=-1, keepdims=True)      # (n, 1)
    dst = lax.dot_general(pdst, hp, (((1,), (1,)), ((), ())),
                          preferred_element_type=f32)     # (1, n)
    e = src + dst
    e = jnp.where(e > 0.0, e, 0.2 * e)
    mask = adj > 0.0
    e = jnp.where(mask, e, -1e9)
    e = e - jnp.max(e, axis=-1, keepdims=True)
    p = jnp.where(mask, jnp.exp(e), 0.0)
    denom = jnp.sum(p, axis=-1, keepdims=True)
    attn = p / jnp.maximum(denom, 1e-20)                  # all-masked row -> zero row
    comm2 = jnp.dot(attn, hp, preferred_element_type=f32)  # (n, 24)

    # ---- Decoder: Linear(24,32) -> ReLU -> Linear(32,16) ----
    hd = (jnp.dot(comm2, slab_ref[_R_DEC_W1:_R_DEC_W1 + PROC_OUT, 0:DEC_HID],
                  preferred_element_type=f32)
          + vec[_V_DEC_B1:_V_DEC_B1 + 1, 0:DEC_HID])
    hd = jnp.maximum(hd, 0.0)
    y = (jnp.dot(hd, slab_ref[_R_DEC_W2:_R_DEC_W2 + DEC_HID, 0:DEC_OUT],
                 preferred_element_type=f32)
         + vec[_V_DEC_B2:_V_DEC_B2 + 1, 0:DEC_OUT])

    # single lane-concatenated store: decoder output in lanes 0:16, adj in 16:16+n
    out_ref[...] = jnp.concatenate([y, adj], axis=-1).astype(out_ref.dtype)


# --------------------------------- wrapper -------------------------------------
def _vmem_spec():
    return pl.BlockSpec(memory_space=pltpu.MemorySpace.VMEM)


def magic_forward(params, x, key, timestep=0, update_lstm_hidden_state=False):
    """x: [1, num_agents, input_dim]; key: jax PRNG key for the gumbel-softmax sample."""
    del timestep, update_lstm_hidden_state  # LSTM / message_encoder disabled in this config
    _, n, _ = x.shape
    # Two-class hard gumbel-softmax only needs (g1 - g0) ~ Logistic(0, 1).
    noise = jax.random.logistic(key, (n, n), jnp.float32)
    fused = pl.pallas_call(
        magic_fused_kernel,
        out_shape=jax.ShapeDtypeStruct((n, DEC_OUT + n), jnp.float32),
        in_specs=[_vmem_spec(), _vmem_spec(), _vmem_spec()],
        out_specs=_vmem_spec(),
    )(x, noise, params["slab"])
    out = fused[:, :DEC_OUT]
    adj = fused[:, DEC_OUT:DEC_OUT + n]
    return out, adj


# ------------------------------ parameter init ---------------------------------
def init_params(key):
    ks = jax.random.split(key, 12)

    def lin(k, din, dout):
        kw, kb = jax.random.split(k)
        w = jax.random.normal(kw, (din, dout), jnp.float32) / jnp.sqrt(float(din))
        b = 0.01 * jax.random.normal(kb, (dout,), jnp.float32)
        return w, b

    ew1, eb1 = lin(ks[0], INPUT_DIM, OBS_HID)
    ew2, eb2 = lin(ks[1], OBS_HID, OBS_OUT)

    sgw = jax.random.normal(ks[2], (OBS_OUT, SCHED_GAT_OUT), jnp.float32) / jnp.sqrt(float(OBS_OUT))
    s_asrc = 0.1 * jax.random.normal(ks[3], (SCHED_GAT_OUT,), jnp.float32)
    s_adst = 0.1 * jax.random.normal(ks[4], (SCHED_GAT_OUT,), jnp.float32)
    smw1, smb1 = lin(ks[5], 2 * SCHED_GAT_OUT, SCHED_MLP_HID)
    smw2, smb2 = lin(ks[6], SCHED_MLP_HID, 2)

    pgw = jax.random.normal(ks[7], (OBS_OUT, PROC_OUT), jnp.float32) / jnp.sqrt(float(OBS_OUT))
    p_asrc = 0.1 * jax.random.normal(ks[8], (PROC_OUT,), jnp.float32)
    p_adst = 0.1 * jax.random.normal(ks[9], (PROC_OUT,), jnp.float32)

    dw1, db1 = lin(ks[10], PROC_OUT, DEC_HID)
    dw2, db2 = lin(ks[11], DEC_HID, DEC_OUT)

    # Pack EVERYTHING into one sublane-stacked, 8-row-aligned slab -> one DMA.
    slab = jnp.zeros((SLAB_ROWS, SLAB_COLS), jnp.float32)
    slab = slab.at[_R_ENC_W1:_R_ENC_W1 + INPUT_DIM, 0:OBS_HID].set(ew1)
    slab = slab.at[_R_ENC_W2:_R_ENC_W2 + OBS_HID, 0:OBS_OUT].set(ew2)
    slab = slab.at[_R_GAT_W:_R_GAT_W + OBS_OUT, 0:SCHED_GAT_OUT].set(sgw)
    slab = slab.at[_R_GAT_W:_R_GAT_W + OBS_OUT,
                   SCHED_GAT_OUT:SCHED_GAT_OUT + PROC_OUT].set(pgw)
    slab = slab.at[_R_SMLP_W1:_R_SMLP_W1 + SCHED_GAT_OUT,
                   0:SCHED_MLP_HID].set(smw1[:SCHED_GAT_OUT])
    slab = slab.at[_R_SMLP_W1:_R_SMLP_W1 + SCHED_GAT_OUT,
                   SCHED_MLP_HID:2 * SCHED_MLP_HID].set(smw1[SCHED_GAT_OUT:])
    slab = slab.at[_R_DEC_W1:_R_DEC_W1 + PROC_OUT, 0:DEC_HID].set(dw1)
    slab = slab.at[_R_DEC_W2:_R_DEC_W2 + DEC_HID, 0:DEC_OUT].set(dw2)

    v = _R_VEC
    slab = slab.at[v + _V_ENC_B1, 0:OBS_HID].set(eb1)
    slab = slab.at[v + _V_ENC_B2, 0:OBS_OUT].set(eb2)
    slab = slab.at[v + _V_SMLP_B1, 0:SCHED_MLP_HID].set(smb1)
    slab = slab.at[v + _V_DEC_B1, 0:DEC_HID].set(db1)
    slab = slab.at[v + _V_DEC_B2, 0:DEC_OUT].set(db2)
    slab = slab.at[v + _V_SGAT_ASRC, 0:SCHED_GAT_OUT].set(s_asrc)
    slab = slab.at[v + _V_SGAT_ADST, 0:SCHED_GAT_OUT].set(s_adst)
    slab = slab.at[v + _V_SMLP_W2D, 0:SCHED_MLP_HID].set(smw2[:, 1] - smw2[:, 0])
    slab = slab.at[v + _V_SMLP_B2D, 0].set(smb2[1] - smb2[0])
    slab = slab.at[v + _V_PGAT_ASRC, 0:PROC_OUT].set(p_asrc)
    slab = slab.at[v + _V_PGAT_ADST, 0:PROC_OUT].set(p_adst)

    return dict(slab=slab)


# ----------------------------------- main ---------------------------------------
if __name__ == "__main__":
    key = jax.random.PRNGKey(0)
    pkey, xkey, nkey = jax.random.split(key, 3)
    params = init_params(pkey)
    x = jax.random.normal(xkey, (1, NUM_AGENTS, INPUT_DIM), jnp.float32)

    fwd = jax.jit(magic_forward)
    out, adj = fwd(params, x, nkey)
    jax.block_until_ready((out, adj))

    assert out.shape == (NUM_AGENTS, DEC_OUT) and out.dtype == jnp.float32
    assert adj.shape == (NUM_AGENTS, NUM_AGENTS)
    assert bool(jnp.all(jnp.isfinite(out)))
    assert bool(jnp.all((adj == 0.0) | (adj == 1.0)))
    print("KERNEL_OK")
</pallas_src>

<mosaic_0001>
module attributes {stable_mosaic.version = 11 : i64} {
  func.func @magic_fused_kernel(%arg0: memref<1x8x20xf32, #tpu.memory_space<vmem>>, %arg1: memref<8x8xf32, #tpu.memory_space<vmem>>, %arg2: memref<176x64xf32, #tpu.memory_space<vmem>>, %arg3: memref<8x24xf32, #tpu.memory_space<vmem>>) attributes {dimension_semantics = [], scalar_prefetch = 0 : i64, scratch_operands = 0 : i64, tpu.core_type = #tpu.core_type<tc>} {
    %c0 = arith.constant 0 : index
    %c0_0 = arith.constant 0 : index
    %c0_1 = arith.constant 0 : index
    %0 = vector.load %arg0[%c0, %c0_0, %c0_1] : memref<1x8x20xf32, #tpu.memory_space<vmem>>, vector<1x8x20xf32>
    %1 = vector.shape_cast %0 : vector<1x8x20xf32> to vector<8x20xf32>
    %c160 = arith.constant 160 : index
    %c0_2 = arith.constant 0 : index
    %2 = vector.load %arg2[%c160, %c0_2] : memref<176x64xf32, #tpu.memory_space<vmem>>, vector<16x32xf32>
    %c0_3 = arith.constant 0 : index
    %c0_4 = arith.constant 0 : index
    %3 = vector.load %arg2[%c0_3, %c0_4] : memref<176x64xf32, #tpu.memory_space<vmem>>, vector<20x32xf32>
    %cst = arith.constant dense<0.000000e+00> : vector<8x32xf32>
    %4 = tpu.matmul %1, %3, %cst {dimension_numbers = #tpu.dot_dimension_numbers<[1], [0], [0], [1], [0, 0, 1, 1], [], []>} : vector<8x20xf32>, vector<20x32xf32>, vector<8x32xf32> -> vector<8x32xf32>
    %5 = vector.extract_strided_slice %2 {offsets = [0, 0], sizes = [1, 32], strides = [1, 1]} : vector<16x32xf32> to vector<1x32xf32>
    %6 = vector.broadcast %5 : vector<1x32xf32> to vector<8x32xf32>
    %7 = arith.addf %4, %6 : vector<8x32xf32>
    %cst_5 = arith.constant 0.000000e+00 : f32
    %8 = vector.broadcast %cst_5 : f32 to vector<8x32xf32>
    %9 = arith.maximumf %7, %8 : vector<8x32xf32>
    %c24 = arith.constant 24 : index
    %c0_6 = arith.constant 0 : index
    %10 = vector.load %arg2[%c24, %c0_6] : memref<176x64xf32, #tpu.memory_space<vmem>>, vector<32x32xf32>
    %cst_7 = arith.constant dense<0.000000e+00> : vector<8x32xf32>
    %11 = tpu.matmul %9, %10, %cst_7 {dimension_numbers = #tpu.dot_dimension_numbers<[1], [0], [0], [1], [0, 0, 1, 1], [], []>} : vector<8x32xf32>, vector<32x32xf32>, vector<8x32xf32> -> vector<8x32xf32>
    %12 = vector.extract_strided_slice %2 {offsets = [1, 0], sizes = [1, 32], strides = [1, 1]} : vector<16x32xf32> to vector<1x32xf32>
    %13 = vector.broadcast %12 : vector<1x32xf32> to vector<8x32xf32>
    %14 = arith.addf %11, %13 : vector<8x32xf32>
    %c56 = arith.constant 56 : index
    %c0_8 = arith.constant 0 : index
    %15 = vector.load %arg2[%c56, %c0_8] : memref<176x64xf32, #tpu.memory_space<vmem>>, vector<32x40xf32>
    %cst_9 = arith.constant dense<0.000000e+00> : vector<8x40xf32>
    %16 = tpu.matmul %14, %15, %cst_9 {dimension_numbers = #tpu.dot_dimension_numbers<[1], [0], [0], [1], [0, 0, 1, 1], [], []>} : vector<8x32xf32>, vector<32x40xf32>, vector<8x40xf32> -> vector<8x40xf32>
    %17 = vector.extract_strided_slice %16 {offsets = [0, 0], sizes = [8, 16], strides = [1, 1]} : vector<8x40xf32> to vector<8x16xf32>
    %18 = vector.extract_strided_slice %16 {offsets = [0, 16], sizes = [8, 24], strides = [1, 1]} : vector<8x40xf32> to vector<8x24xf32>
    %19 = vector.extract_strided_slice %2 {offsets = [5, 0], sizes = [1, 16], strides = [1, 1]} : vector<16x32xf32> to vector<1x16xf32>
    %20 = vector.extract_strided_slice %2 {offsets = [6, 0], sizes = [1, 16], strides = [1, 1]} : vector<16x32xf32> to vector<1x16xf32>
    %21 = vector.broadcast %19 : vector<1x16xf32> to vector<8x16xf32>
    %22 = arith.mulf %17, %21 : vector<8x16xf32>
    %cst_10 = arith.constant dense<0.000000e+00> : vector<8xf32>
    %23 = vector.multi_reduction <add>, %22, %cst_10 [1] : vector<8x16xf32> to vector<8xf32>
    %24 = vector.shape_cast %23 : vector<8xf32> to vector<8x1xf32>
    %cst_11 = arith.constant dense<0.000000e+00> : vector<1x8xf32>
    %25 = tpu.matmul %20, %17, %cst_11 {dimension_numbers = #tpu.dot_dimension_numbers<[1], [1], [0], [0], [0, 0, 1, 0], [], []>} : vector<1x16xf32>, vector<8x16xf32>, vector<1x8xf32> -> vector<1x8xf32>
    %26 = vector.broadcast %24 : vector<8x1xf32> to vector<8x8xf32>
    %27 = vector.broadcast %25 : vector<1x8xf32> to vector<8x8xf32>
    %28 = arith.addf %26, %27 : vector<8x8xf32>
    %cst_12 = arith.constant 0.000000e+00 : f32
    %29 = vector.broadcast %cst_12 : f32 to vector<8x8xf32>
    %30 = arith.cmpf ogt, %28, %29 : vector<8x8xf32>
    %cst_13 = arith.constant 2.000000e-01 : f32
    %31 = vector.broadcast %cst_13 : f32 to vector<8x8xf32>
    %32 = arith.mulf %31, %28 : vector<8x8xf32>
    %33 = arith.select %30, %28, %32 : vector<8x8xi1>, vector<8x8xf32>
    %cst_14 = arith.constant dense<0xFF800000> : vector<8xf32>
    %34 = vector.multi_reduction <maximumf>, %33, %cst_14 [1] : vector<8x8xf32> to vector<8xf32>
    %35 = vector.shape_cast %34 : vector<8xf32> to vector<8x1xf32>
    %36 = vector.broadcast %35 : vector<8x1xf32> to vector<8x8xf32>
    %37 = arith.subf %33, %36 : vector<8x8xf32>
    %38 = math.exp %37 : vector<8x8xf32>
    %cst_15 = arith.constant dense<0.000000e+00> : vector<8xf32>
    %39 = vector.multi_reduction <add>, %38, %cst_15 [1] : vector<8x8xf32> to vector<8xf32>
    %40 = vector.shape_cast %39 : vector<8xf32> to vector<8x1xf32>
    %41 = vector.broadcast %40 : vector<8x1xf32> to vector<8x8xf32>
    %42 = arith.divf %38, %41 : vector<8x8xf32>
    %cst_16 = arith.constant dense<0.000000e+00> : vector<8x16xf32>
    %43 = tpu.matmul %42, %17, %cst_16 {dimension_numbers = #tpu.dot_dimension_numbers<[1], [0], [0], [1], [0, 0, 1, 1], [], []>} : vector<8x8xf32>, vector<8x16xf32>, vector<8x16xf32> -> vector<8x16xf32>
    %c88 = arith.constant 88 : index
    %c0_17 = arith.constant 0 : index
    %44 = vector.load %arg2[%c88, %c0_17] : memref<176x64xf32, #tpu.memory_space<vmem>>, vector<16x64xf32>
    %cst_18 = arith.constant dense<0.000000e+00> : vector<8x64xf32>
    %45 = tpu.matmul %43, %44, %cst_18 {dimension_numbers = #tpu.dot_dimension_numbers<[1], [0], [0], [1], [0, 0, 1, 1], [], []>} : vector<8x16xf32>, vector<16x64xf32>, vector<8x64xf32> -> vector<8x64xf32>
    %46 = vector.extract_strided_slice %45 {offsets = [0, 0], sizes = [8, 32], strides = [1, 1]} : vector<8x64xf32> to vector<8x32xf32>
    %47 = vector.extract_strided_slice %2 {offsets = [2, 0], sizes = [1, 32], strides = [1, 1]} : vector<16x32xf32> to vector<1x32xf32>
    %48 = vector.broadcast %47 : vector<1x32xf32> to vector<8x32xf32>
    %49 = arith.addf %46, %48 : vector<8x32xf32>
    %50 = vector.extract_strided_slice %45 {offsets = [0, 32], sizes = [8, 32], strides = [1, 1]} : vector<8x64xf32> to vector<8x32xf32>
    %51 = vector.shape_cast %49 : vector<8x32xf32> to vector<8x1x32xf32>
    %52 = vector.shape_cast %50 : vector<8x32xf32> to vector<1x8x32xf32>
    %53 = vector.broadcast %51 : vector<8x1x32xf32> to vector<8x8x32xf32>
    %54 = vector.broadcast %52 : vector<1x8x32xf32> to vector<8x8x32xf32>
    %55 = arith.addf %53, %54 : vector<8x8x32xf32>
    %cst_19 = arith.constant 0.000000e+00 : f32
    %56 = vector.broadcast %cst_19 : f32 to vector<8x8x32xf32>
    %57 = arith.maximumf %55, %56 : vector<8x8x32xf32>
    %58 = vector.extract_strided_slice %2 {offsets = [7, 0], sizes = [1, 32], strides = [1, 1]} : vector<16x32xf32> to vector<1x32xf32>
    %59 = vector.extract_strided_slice %2 {offsets = [8, 0], sizes = [1, 1], strides = [1, 1]} : vector<16x32xf32> to vector<1x1xf32>
    %60 = vector.shape_cast %58 : vector<1x32xf32> to vector<1x1x32xf32>
    %61 = vector.broadcast %60 : vector<1x1x32xf32> to vector<8x8x32xf32>
    %62 = arith.mulf %57, %61 : vector<8x8x32xf32>
    %cst_20 = arith.constant dense<0.000000e+00> : vector<8x8xf32>
    %63 = vector.multi_reduction <add>, %62, %cst_20 [2] : vector<8x8x32xf32> to vector<8x8xf32>
    %64 = vector.broadcast %59 : vector<1x1xf32> to vector<8x8xf32>
    %65 = arith.addf %63, %64 : vector<8x8xf32>
    %c0_21 = arith.constant 0 : index
    %c0_22 = arith.constant 0 : index
    %66 = vector.load %arg1[%c0_21, %c0_22] : memref<8x8xf32, #tpu.memory_space<vmem>>, vector<8x8xf32>
    %67 = arith.addf %65, %66 : vector<8x8xf32>
    %cst_23 = arith.constant 0.000000e+00 : f32
    %68 = vector.broadcast %cst_23 : f32 to vector<8x8xf32>
    %69 = arith.cmpf ogt, %67, %68 : vector<8x8xf32>
    %70 = arith.extui %69 : vector<8x8xi1> to vector<8x8xi32>
    %71 = arith.sitofp %70 : vector<8x8xi32> to vector<8x8xf32>
    %72 = vector.extract_strided_slice %2 {offsets = [9, 0], sizes = [1, 24], strides = [1, 1]} : vector<16x32xf32> to vector<1x24xf32>
    %73 = vector.extract_strided_slice %2 {offsets = [10, 0], sizes = [1, 24], strides = [1, 1]} : vector<16x32xf32> to vector<1x24xf32>
    %74 = vector.broadcast %72 : vector<1x24xf32> to vector<8x24xf32>
    %75 = arith.mulf %18, %74 : vector<8x24xf32>
    %cst_24 = arith.constant dense<0.000000e+00> : vector<8xf32>
    %76 = vector.multi_reduction <add>, %75, %cst_24 [1] : vector<8x24xf32> to vector<8xf32>
    %77 = vector.shape_cast %76 : vector<8xf32> to vector<8x1xf32>
    %cst_25 = arith.constant dense<0.000000e+00> : vector<1x8xf32>
    %78 = tpu.matmul %73, %18, %cst_25 {dimension_numbers = #tpu.dot_dimension_numbers<[1], [1], [0], [0], [0, 0, 1, 0], [], []>} : vector<1x24xf32>, vector<8x24xf32>, vector<1x8xf32> -> vector<1x8xf32>
    %79 = vector.broadcast %77 : vector<8x1xf32> to vector<8x8xf32>
    %80 = vector.broadcast %78 : vector<1x8xf32> to vector<8x8xf32>
    %81 = arith.addf %79, %80 : vector<8x8xf32>
    %cst_26 = arith.constant 0.000000e+00 : f32
    %82 = vector.broadcast %cst_26 : f32 to vector<8x8xf32>
    %83 = arith.cmpf ogt, %81, %82 : vector<8x8xf32>
    %cst_27 = arith.constant 2.000000e-01 : f32
    %84 = vector.broadcast %cst_27 : f32 to vector<8x8xf32>
    %85 = arith.mulf %84, %81 : vector<8x8xf32>
    %86 = arith.select %83, %81, %85 : vector<8x8xi1>, vector<8x8xf32>
    %cst_28 = arith.constant 0.000000e+00 : f32
    %87 = vector.broadcast %cst_28 : f32 to vector<8x8xf32>
    %88 = arith.cmpf ogt, %71, %87 : vector<8x8xf32>
    %cst_29 = arith.constant -1.000000e+09 : f32
    %89 = vector.broadcast %cst_29 : f32 to vector<8x8xf32>
    %90 = arith.select %88, %86, %89 : vector<8x8xi1>, vector<8x8xf32>
    %cst_30 = arith.constant dense<0xFF800000> : vector<8xf32>
    %91 = vector.multi_reduction <maximumf>, %90, %cst_30 [1] : vector<8x8xf32> to vector<8xf32>
    %92 = vector.shape_cast %91 : vector<8xf32> to vector<8x1xf32>
    %93 = vector.broadcast %92 : vector<8x1xf32> to vector<8x8xf32>
    %94 = arith.subf %90, %93 : vector<8x8xf32>
    %95 = math.exp %94 : vector<8x8xf32>
    %cst_31 = arith.constant 0.000000e+00 : f32
    %96 = vector.broadcast %cst_31 : f32 to vector<8x8xf32>
    %97 = arith.select %88, %95, %96 : vector<8x8xi1>, vector<8x8xf32>
    %cst_32 = arith.constant dense<0.000000e+00> : vector<8xf32>
    %98 = vector.multi_reduction <add>, %97, %cst_32 [1] : vector<8x8xf32> to vector<8xf32>
    %99 = vector.shape_cast %98 : vector<8xf32> to vector<8x1xf32>
    %cst_33 = arith.constant 9.99999968E-21 : f32
    %100 = vector.broadcast %cst_33 : f32 to vector<8x1xf32>
    %101 = arith.maximumf %99, %100 : vector<8x1xf32>
    %102 = vector.broadcast %101 : vector<8x1xf32> to vector<8x8xf32>
    %103 = arith.divf %97, %102 : vector<8x8xf32>
    %cst_34 = arith.constant dense<0.000000e+00> : vector<8x24xf32>
    %104 = tpu.matmul %103, %18, %cst_34 {dimension_numbers = #tpu.dot_dimension_numbers<[1], [0], [0], [1], [0, 0, 1, 1], [], []>} : vector<8x8xf32>, vector<8x24xf32>, vector<8x24xf32> -> vector<8x24xf32>
    %c104 = arith.constant 104 : index
    %c0_35 = arith.constant 0 : index
    %105 = vector.load %arg2[%c104, %c0_35] : memref<176x64xf32, #tpu.memory_space<vmem>>, vector<24x32xf32>
    %cst_36 = arith.constant dense<0.000000e+00> : vector<8x32xf32>
    %106 = tpu.matmul %104, %105, %cst_36 {dimension_numbers = #tpu.dot_dimension_numbers<[1], [0], [0], [1], [0, 0, 1, 1], [], []>} : vector<8x24xf32>, vector<24x32xf32>, vector<8x32xf32> -> vector<8x32xf32>
    %107 = vector.extract_strided_slice %2 {offsets = [3, 0], sizes = [1, 32], strides = [1, 1]} : vector<16x32xf32> to vector<1x32xf32>
    %108 = vector.broadcast %107 : vector<1x32xf32> to vector<8x32xf32>
    %109 = arith.addf %106, %108 : vector<8x32xf32>
    %cst_37 = arith.constant 0.000000e+00 : f32
    %110 = vector.broadcast %cst_37 : f32 to vector<8x32xf32>
    %111 = arith.maximumf %109, %110 : vector<8x32xf32>
    %c128 = arith.constant 128 : index
    %c0_38 = arith.constant 0 : index
    %112 = vector.load %arg2[%c128, %c0_38] : memref<176x64xf32, #tpu.memory_space<vmem>>, vector<32x16xf32>
    %cst_39 = arith.constant dense<0.000000e+00> : vector<8x16xf32>
    %113 = tpu.matmul %111, %112, %cst_39 {dimension_numbers = #tpu.dot_dimension_numbers<[1], [0], [0], [1], [0, 0, 1, 1], [], []>} : vector<8x32xf32>, vector<32x16xf32>, vector<8x16xf32> -> vector<8x16xf32>
    %114 = vector.extract_strided_slice %2 {offsets = [4, 0], sizes = [1, 16], strides = [1, 1]} : vector<16x32xf32> to vector<1x16xf32>
    %115 = vector.broadcast %114 : vector<1x16xf32> to vector<8x16xf32>
    %116 = arith.addf %113, %115 : vector<8x16xf32>
    %117 = tpu.concatenate %116, %71 in 1 : vector<8x16xf32>, vector<8x8xf32> -> vector<8x24xf32>
    %c0_40 = arith.constant 0 : index
    %c0_41 = arith.constant 0 : index
    %118 = vector.load %arg3[%c0_40, %c0_41] : memref<8x24xf32, #tpu.memory_space<vmem>>, vector<8x24xf32>
    tpu.vector_store %arg3[%c0_40, %c0_41], %117 {strides = array<i32>} : memref<8x24xf32, #tpu.memory_space<vmem>>, vector<8x24xf32>,
    return
  }
}

</mosaic_0001>

<llo_original>
// kernel: magic_forward.1
$region0: #{magic_forward.1}
  #allocation0 [shape = 'u32[]', space=smem, size = 0x4, offset = 0x4, fixed_abs, tag = 'smem constant byte address 0x4 - core index']
  #allocation1 [shape = 'u32[144,128]{1,0:T(1,128)}', space=vmem, size = 0x12000, scoped, tag = 'internal scratch']
  %s0 = inlined_call_operand.vmem [shape: f32[1,8,20], index: 0, kind: input, shape index: {}]
  %s1 = inlined_call_operand.vmem [shape: f32[8,8], index: 1, kind: input, shape index: {}]
  %s2 = inlined_call_operand.vmem [shape: f32[176,64], index: 2, kind: input, shape index: {}]
  %s3 = inlined_call_operand.vmem [shape: f32[8,24], index: 3, kind: output, shape index: {}]
  %s4 = sld [smem:[#allocation0]]
  $region22: #{magic_forward.1} parent=0
    _
  %s6 = ssub.s32 1, %s4
  %s7 = scalar_select 0, %s6, %s4
  // Predicated region
  $region2: #{magic_forward.1} parent=0 // pred_check
    _
  $region3: #{magic_forward.1} parent=0 // pred_check_branch
    %9 = sbr.rel (0) target = $region5
  $region4: #{magic_forward.1} parent=0 // pred_region
    _
  $region5: #{magic_forward.1} parent=0 // pred_fallthru
    _
  // Predicated region
  $region6: #{magic_forward.1} parent=0 // pred_check
    _
  $region7: #{magic_forward.1} parent=0 // pred_check_branch
    %11 = sbr.rel (0) target = $region9
  $region8: #{magic_forward.1} parent=0 // pred_region
    _
  $region9: #{magic_forward.1} parent=0 // pred_fallthru
    _
  // Predicated region
  $region10: #{magic_forward.1} parent=0 // pred_check
    _
  $region11: #{magic_forward.1} parent=0 // pred_check_branch
    %13 = sbr.rel (0) target = $region13
  $region12: #{magic_forward.1} parent=0 // pred_region
    _
  $region13: #{magic_forward.1} parent=0 // pred_fallthru
    _
  %v14 = vld [vmem:[%s0] sm:$0xff]
  %v15 = vld [vmem:[%s2 + $0xa0] sm:$0xff]
  %v16 = vld [vmem:[%s2 + $0xa8] sm:$0xff]
  %v17 = vld [vmem:[%s2] sm:$0xff]
  %v18 = vld [vmem:[%s2 + $0x8] sm:$0xff]
  %v19 = vld [vmem:[%s2 + $0x10] sm:$0xf]
  %v20 = vlaneseq
  %v21 = vshrl.u32 %v20, 7
  %v22 = vsub.s32 0, %v21
  %v23 = vrot.slane %v15, %v22
  %vm24 = vcmask 162816
  %v26 = vsel %vm24, %v14, 0
  %vm28 = vcmask 1043456
  %v30 = vsel %vm28, %v19, 0
  %32 = vmatprep.subr.mxu0 0.0
  %33 = vmatpush1.msra.mxu0 %v17
  %34 = vmatprep.subr.mxu0 0.0
  %35 = vmatpush1.msra.mxu0 %v18
  %36 = vmatprep.subr.mxu0 0.0
  %37 = vmatpush1.msra.mxu0 %v30
  %38 = vmatprep.subr.mxu0 0.0
  %39 = vmatpush1.msra.mxu0 0.0
  %40 = vmatprep.subr.mxu0 0.0
  %41 = vmatpush1.msra.mxu0 0.0
  %42 = vmatprep.subr.mxu0 0.0
  %43 = vmatpush1.msra.mxu0 0.0
  %44 = vmatprep.subr.mxu0 0.0
  %45 = vmatpush1.msra.mxu0 0.0
  %46 = vmatprep.subr.mxu0 0.0
  %47 = vmatpush1.msra.mxu0 0.0
  %48 = vmatprep.subr.mxu0 0.0
  %49 = vmatpush1.msra.mxu0 0.0
  %50 = vmatprep.subr.mxu0 0.0
  %51 = vmatpush1.msra.mxu0 0.0
  %52 = vmatprep.subr.mxu0 0.0
  %53 = vmatpush1.msra.mxu0 0.0
  %54 = vmatprep.subr.mxu0 0.0
  %55 = vmatpush1.msra.mxu0 0.0
  %56 = vmatprep.subr.mxu0 0.0
  %57 = vmatpush1.msra.mxu0 0.0
  %58 = vmatprep.subr.mxu0 0.0
  %59 = vmatpush1.msra.mxu0 0.0
  %60 = vmatprep.subr.mxu0 0.0
  %61 = vmatpush1.msra.mxu0 0.0
  %62 = vmatprep.subr.mxu0 0.0
  %63 = vmatpush1.msra.mxu0 0.0
  %64 = vmatprep.subr.mxu0 0.0
  %65 = vmatpush1.msra.mxu0 0.0
  %66 = vmatprep.subr.mxu0 0.0
  %67 = vmatpush1.msra.mxu0 0.0
  %68 = vmatprep.subr.mxu0 0.0
  %69 = vmatpush1.msra.mxu0 0.0
  %70 = vmatprep.subr.mxu0 0.0
  %71 = vmatpush1.msra.mxu0 0.0
  %72 = vmatprep.subr.mxu0 0.0
  %73 = vmatpush1.msra.mxu0 0.0
  %74 = vmatprep.subr.mxu0 0.0
  %75 = vmatpush1.msra.mxu0 0.0
  %76 = vmatprep.subr.mxu0 0.0
  %77 = vmatpush1.msra.mxu0 0.0
  %78 = vmatprep.subr.mxu0 0.0
  %79 = vmatpush1.msra.mxu0 0.0
  %80 = vmatprep.subr.mxu0 0.0
  %81 = vmatpush1.msra.mxu0 0.0
  %82 = vmatprep.subr.mxu0 0.0
  %83 = vmatpush1.msra.mxu0 0.0
  %84 = vmatprep.subr.mxu0 0.0
  %85 = vmatpush1.msra.mxu0 0.0
  %86 = vmatprep.subr.mxu0 0.0
  %87 = vmatpush1.msra.mxu0 0.0
  %88 = vmatprep.subr.mxu0 0.0
  %89 = vmatpush1.msra.mxu0 0.0
  %90 = vmatprep.subr.mxu0 0.0
  %91 = vmatpush1.msra.mxu0 0.0
  %92 = vmatprep.subr.mxu0 0.0
  %93 = vmatpush1.msra.mxu0 0.0
  %94 = vmatprep.subr.mxu0 0.0
  %95 = vmatpush1.msra.mxu0 0.0
  %96 = vmatprep.mubr.f32.mxu0 0.0
  %97 = vmatmul.mubr.f32.gmra.mrb[0].mxu0 %v26
  %v98 = vpop.f32.mrb[0].mxu0
  %v99 = vadd.f32 %v23, %v98
  %v100 = vpop.f32.mrb[0].mxu0
  %101 = vdwg.mxu0
  %v102 = vmax.f32 %v99, 0.0
  %v103 = vld [vmem:[%s2 + $0x18] sm:$0xff]
  %v104 = vld [vmem:[%s2 + $0x20] sm:$0xff]
  %v105 = vld [vmem:[%s2 + $0x28] sm:$0xff]
  %v106 = vld [vmem:[%s2 + $0x30] sm:$0xff]
  %v107 = vlaneseq
  %v108 = vshrl.u32 %v107, 7
  %v109 = vsub.s32 1, %v108
  %v110 = vrot.slane %v15, %v109
  %vm111 = vcmask 261120
  %v113 = vsel %vm111, %v102, 0
  %115 = vmatprep.subr.mxu0 0.0
  %116 = vmatpush1.msra.mxu0 %v103
  %117 = vmatprep.subr.mxu0 0.0
  %118 = vmatpush1.msra.mxu0 %v104
  %119 = vmatprep.subr.mxu0 0.0
  %120 = vmatpush1.msra.mxu0 %v105
  %121 = vmatprep.subr.mxu0 0.0
  %122 = vmatpush1.msra.mxu0 %v106
  %123 = vmatprep.subr.mxu0 0.0
  %124 = vmatpush1.msra.mxu0 0.0
  %125 = vmatprep.subr.mxu0 0.0
  %126 = vmatpush1.msra.mxu0 0.0
  %127 = vmatprep.subr.mxu0 0.0
  %128 = vmatpush1.msra.mxu0 0.0
  %129 = vmatprep.subr.mxu0 0.0
  %130 = vmatpush1.msra.mxu0 0.0
  %131 = vmatprep.subr.mxu0 0.0
  %132 = vmatpush1.msra.mxu0 0.0
  %133 = vmatprep.subr.mxu0 0.0
  %134 = vmatpush1.msra.mxu0 0.0
  %135 = vmatprep.subr.mxu0 0.0
  %136 = vmatpush1.msra.mxu0 0.0
  %137 = vmatprep.subr.mxu0 0.0
  %138 = vmatpush1.msra.mxu0 0.0
  %139 = vmatprep.subr.mxu0 0.0
  %140 = vmatpush1.msra.mxu0 0.0
  %141 = vmatprep.subr.mxu0 0.0
  %142 = vmatpush1.msra.mxu0 0.0
  %143 = vmatprep.subr.mxu0 0.0
  %144 = vmatpush1.msra.mxu0 0.0
  %145 = vmatprep.subr.mxu0 0.0
  %146 = vmatpush1.msra.mxu0 0.0
  %147 = vmatprep.subr.mxu0 0.0
  %148 = vmatpush1.msra.mxu0 0.0
  %149 = vmatprep.subr.mxu0 0.0
  %150 = vmatpush1.msra.mxu0 0.0
  %151 = vmatprep.subr.mxu0 0.0
  %152 = vmatpush1.msra.mxu0 0.0
  %153 = vmatprep.subr.mxu0 0.0
  %154 = vmatpush1.msra.mxu0 0.0
  %155 = vmatprep.subr.mxu0 0.0
  %156 = vmatpush1.msra.mxu0 0.0
  %157 = vmatprep.subr.mxu0 0.0
  %158 = vmatpush1.msra.mxu0 0.0
  %159 = vmatprep.subr.mxu0 0.0
  %160 = vmatpush1.msra.mxu0 0.0
  %161 = vmatprep.subr.mxu0 0.0
  %162 = vmatpush1.msra.mxu0 0.0
  %163 = vmatprep.subr.mxu0 0.0
  %164 = vmatpush1.msra.mxu0 0.0
  %165 = vmatprep.subr.mxu0 0.0
  %166 = vmatpush1.msra.mxu0 0.0
  %167 = vmatprep.subr.mxu0 0.0
  %168 = vmatpush1.msra.mxu0 0.0
  %169 = vmatprep.subr.mxu0 0.0
  %170 = vmatpush1.msra.mxu0 0.0
  %171 = vmatprep.subr.mxu0 0.0
  %172 = vmatpush1.msra.mxu0 0.0
  %173 = vmatprep.subr.mxu0 0.0
  %174 = vmatpush1.msra.mxu0 0.0
  %175 = vmatprep.subr.mxu0 0.0
  %176 = vmatpush1.msra.mxu0 0.0
  %177 = vmatprep.subr.mxu0 0.0
  %178 = vmatpush1.msra.mxu0 0.0
  %179 = vmatprep.mubr.f32.mxu0 0.0
  %180 = vmatmul.mubr.f32.gmra.mrb[0].mxu0 %v113
  %v181 = vpop.f32.mrb[0].mxu0
  %v182 = vadd.f32 %v110, %v181
  %v183 = vpop.f32.mrb[0].mxu0
  %184 = vdwg.mxu0
  %v185 = vld [vmem:[%s2 + $0x38] sm:$0xff]
  %v186 = vld [vmem:[%s2 + $0x40] sm:$0xff]
  %v187 = vld [vmem:[%s2 + $0x48] sm:$0xff]
  %v188 = vld [vmem:[%s2 + $0x50] sm:$0xff]
  %v190 = vsel %vm111, %v182, 0
  %192 = vmatprep.subr.mxu0 0.0
  %193 = vmatpush1.msra.mxu0 %v185
  %194 = vmatprep.subr.mxu0 0.0
  %195 = vmatpush1.msra.mxu0 %v186
  %196 = vmatprep.subr.mxu0 0.0
  %197 = vmatpush1.msra.mxu0 %v187
  %198 = vmatprep.subr.mxu0 0.0
  %199 = vmatpush1.msra.mxu0 %v188
  %200 = vmatprep.subr.mxu0 0.0
  %201 = vmatpush1.msra.mxu0 0.0
  %202 = vmatprep.subr.mxu0 0.0
  %203 = vmatpush1.msra.mxu0 0.0
  %204 = vmatprep.subr.mxu0 0.0
  %205 = vmatpush1.msra.mxu0 0.0
  %206 = vmatprep.subr.mxu0 0.0
  %207 = vmatpush1.msra.mxu0 0.0
  %208 = vmatprep.subr.mxu0 0.0
  %209 = vmatpush1.msra.mxu0 0.0
  %210 = vmatprep.subr.mxu0 0.0
  %211 = vmatpush1.msra.mxu0 0.0
  %212 = vmatprep.subr.mxu0 0.0
  %213 = vmatpush1.msra.mxu0 0.0
  %214 = vmatprep.subr.mxu0 0.0
  %215 = vmatpush1.msra.mxu0 0.0
  %216 = vmatprep.subr.mxu0 0.0
  %217 = vmatpush1.msra.mxu0 0.0
  %218 = vmatprep.subr.mxu0 0.0
  %219 = vmatpush1.msra.mxu0 0.0
  %220 = vmatprep.subr.mxu0 0.0
  %221 = vmatpush1.msra.mxu0 0.0
  %222 = vmatprep.subr.mxu0 0.0
  %223 = vmatpush1.msra.mxu0 0.0
  %224 = vmatprep.subr.mxu0 0.0
  %225 = vmatpush1.msra.mxu0 0.0
  %226 = vmatprep.subr.mxu0 0.0
  %227 = vmatpush1.msra.mxu0 0.0
  %228 = vmatprep.subr.mxu0 0.0
  %229 = vmatpush1.msra.mxu0 0.0
  %230 = vmatprep.subr.mxu0 0.0
  %231 = vmatpush1.msra.mxu0 0.0
  %232 = vmatprep.subr.mxu0 0.0
  %233 = vmatpush1.msra.mxu0 0.0
  %234 = vmatprep.subr.mxu0 0.0
  %235 = vmatpush1.msra.mxu0 0.0
  %236 = vmatprep.subr.mxu0 0.0
  %237 = vmatpush1.msra.mxu0 0.0
  %238 = vmatprep.subr.mxu0 0.0
  %239 = vmatpush1.msra.mxu0 0.0
  %240 = vmatprep.subr.mxu0 0.0
  %241 = vmatpush1.msra.mxu0 0.0
  %242 = vmatprep.subr.mxu0 0.0
  %243 = vmatpush1.msra.mxu0 0.0
  %244 = vmatprep.subr.mxu0 0.0
  %245 = vmatpush1.msra.mxu0 0.0
  %246 = vmatprep.subr.mxu0 0.0
  %247 = vmatpush1.msra.mxu0 0.0
  %248 = vmatprep.subr.mxu0 0.0
  %249 = vmatpush1.msra.mxu0 0.0
  %250 = vmatprep.subr.mxu0 0.0
  %251 = vmatpush1.msra.mxu0 0.0
  %252 = vmatprep.subr.mxu0 0.0
  %253 = vmatpush1.msra.mxu0 0.0
  %254 = vmatprep.subr.mxu0 0.0
  %255 = vmatpush1.msra.mxu0 0.0
  %256 = vmatprep.mubr.f32.mxu0 0.0
  %257 = vmatmul.mubr.f32.gmra.mrb[0].mxu0 %v190
  %v258 = vpop.f32.mrb[0].mxu0
  %v259 = vadd.f32 0.0, %v258
  %v260 = vpop.f32.mrb[0].mxu0
  %261 = vdwg.mxu0
  %v262 = vlaneseq
  %v263 = vshrl.u32 %v262, 7
  %v264 = vsub.s32 5, %v263
  %v265 = vrot.slane %v15, %v264
  %v266 = vmul.f32 %v259, %v265
  %vm267 = vcmask 130048
  %v268 = vsel %vm267, %v266, 0.0
  %269 = vadd.xlane.f32.xlu0 %v268
  %v270 = vpop.xlane.xlu0 %269
  %v272 = vrot.slane %v15, 6
  %v273 = vsel %vm267, %v272, 0
  %v276 = vsel %vm267, %v259, 0
  %278 = vmatprep.subr.mxu0 0.0
  %279 = vmatpush1.xpose.msra.mxu0 %v276
  %280 = vmatprep.subr.mxu0 0.0
  %281 = vmatpush1.xpose.msra.mxu0 0.0
  %282 = vmatprep.subr.mxu0 0.0
  %283 = vmatpush1.xpose.msra.mxu0 0.0
  %284 = vmatprep.subr.mxu0 0.0
  %285 = vmatpush1.xpose.msra.mxu0 0.0
  %286 = vmatprep.subr.mxu0 0.0
  %287 = vmatpush1.xpose.msra.mxu0 0.0
  %288 = vmatprep.subr.mxu0 0.0
  %289 = vmatpush1.xpose.msra.mxu0 0.0
  %290 = vmatprep.subr.mxu0 0.0
  %291 = vmatpush1.xpose.msra.mxu0 0.0
  %292 = vmatprep.subr.mxu0 0.0
  %293 = vmatpush1.xpose.msra.mxu0 0.0
  %294 = vmatprep.subr.mxu0 0.0
  %295 = vmatpush1.xpose.msra.mxu0 0.0
  %296 = vmatprep.subr.mxu0 0.0
  %297 = vmatpush1.xpose.msra.mxu0 0.0
  %298 = vmatprep.subr.mxu0 0.0
  %299 = vmatpush1.xpose.msra.mxu0 0.0
  %300 = vmatprep.subr.mxu0 0.0
  %301 = vmatpush1.xpose.msra.mxu0 0.0
  %302 = vmatprep.subr.mxu0 0.0
  %303 = vmatpush1.xpose.msra.mxu0 0.0
  %304 = vmatprep.subr.mxu0 0.0
  %305 = vmatpush1.xpose.msra.mxu0 0.0
  %306 = vmatprep.subr.mxu0 0.0
  %307 = vmatpush1.xpose.msra.mxu0 0.0
  %308 = vmatprep.subr.mxu0 0.0
  %309 = vmatpush1.xpose.msra.mxu0 0.0
  %310 = vmatprep.subr.mxu0 0.0
  %311 = vmatpush1.xpose.msra.mxu0 0.0
  %312 = vmatprep.subr.mxu0 0.0
  %313 = vmatpush1.xpose.msra.mxu0 0.0
  %314 = vmatprep.subr.mxu0 0.0
  %315 = vmatpush1.xpose.msra.mxu0 0.0
  %316 = vmatprep.subr.mxu0 0.0
  %317 = vmatpush1.xpose.msra.mxu0 0.0
  %318 = vmatprep.subr.mxu0 0.0
  %319 = vmatpush1.xpose.msra.mxu0 0.0
  %320 = vmatprep.subr.mxu0 0.0
  %321 = vmatpush1.xpose.msra.mxu0 0.0
  %322 = vmatprep.subr.mxu0 0.0
  %323 = vmatpush1.xpose.msra.mxu0 0.0
  %324 = vmatprep.subr.mxu0 0.0
  %325 = vmatpush1.xpose.msra.mxu0 0.0
  %326 = vmatprep.subr.mxu0 0.0
  %327 = vmatpush1.xpose.msra.mxu0 0.0
  %328 = vmatprep.subr.mxu0 0.0
  %329 = vmatpush1.xpose.msra.mxu0 0.0
  %330 = vmatprep.subr.mxu0 0.0
  %331 = vmatpush1.xpose.msra.mxu0 0.0
  %332 = vmatprep.subr.mxu0 0.0
  %333 = vmatpush1.xpose.msra.mxu0 0.0
  %334 = vmatprep.subr.mxu0 0.0
  %335 = vmatpush1.xpose.msra.mxu0 0.0
  %336 = vmatprep.subr.mxu0 0.0
  %337 = vmatpush1.xpose.msra.mxu0 0.0
  %338 = vmatprep.subr.mxu0 0.0
  %339 = vmatpush1.xpose.msra.mxu0 0.0
  %340 = vmatprep.subr.mxu0 0.0
  %341 = vmatpush1.xpose.msra.mxu0 0.0
  %342 = vmatprep.mubr.f32.mxu0 0.0
  %343 = vmatmul.mubr.f32.gmra.mrb[0].mxu0 %v273
  %v344 = vpop.f32.mrb[0].mxu0
  %v345 = vadd.f32 0.0, %v344
  %v346 = vpop.f32.mrb[0].mxu0
  %347 = vdwg.mxu0
  %v348 = vlaneseq
  %v349 = vshrl.u32 %v348, 7
  %v350 = vsub.s32 0, %v349
  %v351 = vrot.slane %v345, %v350
  %v352 = vadd.f32 %v270, %v351
  %vm353 = vcmp.gt.f32.partialorder %v352, 0.0
  %v354 = vmul.f32 %v352, 0.2
  %v355 = vsel %vm353, %v352, %v354
  %vm356 = vcmask 64512
  %v357 = vsel %vm356, %v355, -inf
  %358 = vmax.xlane.f32.xlu0 %v357
  %v359 = vpop.xlane.xlu0 %358
  %v360 = vsub.f32 %v355, %v359
  %v361 = vmul.f32 %v360, 1.442695
  %v362 = vpow.pop %v361
  %v363 = vsel %vm356, %v362, 0.0
  %364 = vadd.xlane.f32.xlu0 %v363
  %v365 = vpop.xlane.xlu0 %364
  %v366 = vrcp.pop %v365
  %v367 = vmul.f32 %v362, %v366
  %v369 = vsel %vm356, %v367, 0
  %371 = vmatprep.subr.mxu0 0.0
  %372 = vmatpush1.msra.mxu0 %v259
  %373 = vmatprep.subr.mxu0 0.0
  %374 = vmatpush1.msra.mxu0 0.0
  %375 = vmatprep.subr.mxu0 0.0
  %376 = vmatpush1.msra.mxu0 0.0
  %377 = vmatprep.subr.mxu0 0.0
  %378 = vmatpush1.msra.mxu0 0.0
  %379 = vmatprep.subr.mxu0 0.0
  %380 = vmatpush1.msra.mxu0 0.0
  %381 = vmatprep.subr.mxu0 0.0
  %382 = vmatpush1.msra.mxu0 0.0
  %383 = vmatprep.subr.mxu0 0.0
  %384 = vmatpush1.msra.mxu0 0.0
  %385 = vmatprep.subr.mxu0 0.0
  %386 = vmatpush1.msra.mxu0 0.0
  %387 = vmatprep.subr.mxu0 0.0
  %388 = vmatpush1.msra.mxu0 0.0
  %389 = vmatprep.subr.mxu0 0.0
  %390 = vmatpush1.msra.mxu0 0.0
  %391 = vmatprep.subr.mxu0 0.0
  %392 = vmatpush1.msra.mxu0 0.0
  %393 = vmatprep.subr.mxu0 0.0
  %394 = vmatpush1.msra.mxu0 0.0
  %395 = vmatprep.subr.mxu0 0.0
  %396 = vmatpush1.msra.mxu0 0.0
  %397 = vmatprep.subr.mxu0 0.0
  %398 = vmatpush1.msra.mxu0 0.0
  %399 = vmatprep.subr.mxu0 0.0
  %400 = vmatpush1.msra.mxu0 0.0
  %401 = vmatprep.subr.mxu0 0.0
  %402 = vmatpush1.msra.mxu0 0.0
  %403 = vmatprep.subr.mxu0 0.0
  %404 = vmatpush1.msra.mxu0 0.0
  %405 = vmatprep.subr.mxu0 0.0
  %406 = vmatpush1.msra.mxu0 0.0
  %407 = vmatprep.subr.mxu0 0.0
  %408 = vmatpush1.msra.mxu0 0.0
  %409 = vmatprep.subr.mxu0 0.0
  %410 = vmatpush1.msra.mxu0 0.0
  %411 = vmatprep.subr.mxu0 0.0
  %412 = vmatpush1.msra.mxu0 0.0
  %413 = vmatprep.subr.mxu0 0.0
  %414 = vmatpush1.msra.mxu0 0.0
  %415 = vmatprep.subr.mxu0 0.0
  %416 = vmatpush1.msra.mxu0 0.0
  %417 = vmatprep.subr.mxu0 0.0
  %418 = vmatpush1.msra.mxu0 0.0
  %419 = vmatprep.subr.mxu0 0.0
  %420 = vmatpush1.msra.mxu0 0.0
  %421 = vmatprep.subr.mxu0 0.0
  %422 = vmatpush1.msra.mxu0 0.0
  %423 = vmatprep.subr.mxu0 0.0
  %424 = vmatpush1.msra.mxu0 0.0
  %425 = vmatprep.subr.mxu0 0.0
  %426 = vmatpush1.msra.mxu0 0.0
  %427 = vmatprep.subr.mxu0 0.0
  %428 = vmatpush1.msra.mxu0 0.0
  %429 = vmatprep.subr.mxu0 0.0
  %430 = vmatpush1.msra.mxu0 0.0
  %431 = vmatprep.subr.mxu0 0.0
  %432 = vmatpush1.msra.mxu0 0.0
  %433 = vmatprep.subr.mxu0 0.0
  %434 = vmatpush1.msra.mxu0 0.0
  %435 = vmatprep.mubr.f32.mxu0 0.0
  %436 = vmatmul.mubr.f32.gmra.mrb[0].mxu0 %v369
  %v437 = vpop.f32.mrb[0].mxu0
  %v438 = vadd.f32 0.0, %v437
  %v439 = vpop.f32.mrb[0].mxu0
  %440 = vdwg.mxu0
  %v441 = vld [vmem:[%s2 + $0x58] sm:$0xff]
  %v442 = vld [vmem:[%s2 + $0x60] sm:$0xff]
  %v444 = vsel %vm267, %v438, 0
  %446 = vmatprep.subr.mxu0 0.0
  %447 = vmatpush1.msra.mxu0 %v441
  %448 = vmatprep.subr.mxu0 0.0
  %449 = vmatpush1.msra.mxu0 %v442
  %450 = vmatprep.subr.mxu0 0.0
  %451 = vmatpush1.msra.mxu0 0.0
  %452 = vmatprep.subr.mxu0 0.0
  %453 = vmatpush1.msra.mxu0 0.0
  %454 = vmatprep.subr.mxu0 0.0
  %455 = vmatpush1.msra.mxu0 0.0
  %456 = vmatprep.subr.mxu0 0.0
  %457 = vmatpush1.msra.mxu0 0.0
  %458 = vmatprep.subr.mxu0 0.0
  %459 = vmatpush1.msra.mxu0 0.0
  %460 = vmatprep.subr.mxu0 0.0
  %461 = vmatpush1.msra.mxu0 0.0
  %462 = vmatprep.subr.mxu0 0.0
  %463 = vmatpush1.msra.mxu0 0.0
  %464 = vmatprep.subr.mxu0 0.0
  %465 = vmatpush1.msra.mxu0 0.0
  %466 = vmatprep.subr.mxu0 0.0
  %467 = vmatpush1.msra.mxu0 0.0
  %468 = vmatprep.subr.mxu0 0.0
  %469 = vmatpush1.msra.mxu0 0.0
  %470 = vmatprep.subr.mxu0 0.0
  %471 = vmatpush1.msra.mxu0 0.0
  %472 = vmatprep.subr.mxu0 0.0
  %473 = vmatpush1.msra.mxu0 0.0
  %474 = vmatprep.subr.mxu0 0.0
  %475 = vmatpush1.msra.mxu0 0.0
  %476 = vmatprep.subr.mxu0 0.0
  %477 = vmatpush1.msra.mxu0 0.0
  %478 = vmatprep.subr.mxu0 0.0
  %479 = vmatpush1.msra.mxu0 0.0
  %480 = vmatprep.subr.mxu0 0.0
  %481 = vmatpush1.msra.mxu0 0.0
  %482 = vmatprep.subr.mxu0 0.0
  %483 = vmatpush1.msra.mxu0 0.0
  %484 = vmatprep.subr.mxu0 0.0
  %485 = vmatpush1.msra.mxu0 0.0
  %486 = vmatprep.subr.mxu0 0.0
  %487 = vmatpush1.msra.mxu0 0.0
  %488 = vmatprep.subr.mxu0 0.0
  %489 = vmatpush1.msra.mxu0 0.0
  %490 = vmatprep.subr.mxu0 0.0
  %491 = vmatpush1.msra.mxu0 0.0
  %492 = vmatprep.subr.mxu0 0.0
  %493 = vmatpush1.msra.mxu0 0.0
  %494 = vmatprep.subr.mxu0 0.0
  %495 = vmatpush1.msra.mxu0 0.0
  %496 = vmatprep.subr.mxu0 0.0
  %497 = vmatpush1.msra.mxu0 0.0
  %498 = vmatprep.subr.mxu0 0.0
  %499 = vmatpush1.msra.mxu0 0.0
  %500 = vmatprep.subr.mxu0 0.0
  %501 = vmatpush1.msra.mxu0 0.0
  %502 = vmatprep.subr.mxu0 0.0
  %503 = vmatpush1.msra.mxu0 0.0
  %504 = vmatprep.subr.mxu0 0.0
  %505 = vmatpush1.msra.mxu0 0.0
  %506 = vmatprep.subr.mxu0 0.0
  %507 = vmatpush1.msra.mxu0 0.0
  %508 = vmatprep.subr.mxu0 0.0
  %509 = vmatpush1.msra.mxu0 0.0
  %510 = vmatprep.mubr.f32.mxu0 0.0
  %511 = vmatmul.mubr.f32.gmra.mrb[0].mxu0 %v444
  %v512 = vpop.f32.mrb[0].mxu0
  %v513 = vadd.f32 0.0, %v512
  %v514 = vpop.f32.mrb[0].mxu0
  %515 = vdwg.mxu0
  %v516 = vlaneseq
  %v517 = vshrl.u32 %v516, 7
  %v518 = vsub.s32 2, %v517
  %v519 = vrot.slane %v15, %v518
  %v520 = vadd.f32 %v513, %v519
  %v522 = vcombine.high %v520, %v520
  %v524 = vunpack.c.l.s4 1966171168
  %v525 = vunpack.c.0.s8 %v524
  %v526 = vlaneseq
  %v527 = vshrl.u32 %v526, 7
  %v528 = vsub.s32 %v525, %v527
  %v529 = vrot.slane %v520, %v528
  %v531 = vunpack.c.l.s4 1966171168
  %v532 = vunpack.c.0.s8 %v531
  %v533 = vlaneseq
  %v534 = vshrl.u32 %v533, 7
  %v535 = vsub.s32 %v532, %v534
  %v536 = vrot.slane %v522, %v535
  %v537 = vcombine.high %v529, %v529
  %v538 = vcombine.high %v536, %v536
  %v540 = vunpack.c.l.s4 1966171168
  %v541 = vunpack.c.0.s8 %v540
  %v542 = vlaneseq
  %v543 = vshrl.u32 %v542, 7
  %v544 = vsub.s32 %v541, %v543
  %v545 = vrot.slane %v529, %v544
  %v547 = vunpack.c.l.s4 1966171168
  %v548 = vunpack.c.0.s8 %v547
  %v549 = vlaneseq
  %v550 = vshrl.u32 %v549, 7
  %v551 = vsub.s32 %v548, %v550
  %v552 = vrot.slane %v536, %v551
  %v554 = vunpack.c.l.s4 1966171168
  %v555 = vunpack.c.0.s8 %v554
  %v556 = vlaneseq
  %v557 = vshrl.u32 %v556, 7
  %v558 = vsub.s32 %v555, %v557
  %v559 = vrot.slane %v537, %v558
  %v561 = vunpack.c.l.s4 1966171168
  %v562 = vunpack.c.0.s8 %v561
  %v563 = vlaneseq
  %v564 = vshrl.u32 %v563, 7
  %v565 = vsub.s32 %v562, %v564
  %v566 = vrot.slane %v538, %v565
  %v567 = vcombine.high %v545, %v545
  %v568 = vcombine.high %v552, %v552
  %v569 = vcombine.high %v559, %v559
  %v570 = vcombine.high %v566, %v566
  %v571 = vlaneseq
  %v572 = vshrl.u32 %v571, 7
  %v573 = vsub.s32 0, %v572
  %v574 = vrot.slane %v545, %v573
  %v575 = vlaneseq
  %v576 = vshrl.u32 %v575, 7
  %v577 = vsub.s32 0, %v576
  %v578 = vrot.slane %v559, %v577
  %v579 = vlaneseq
  %v580 = vshrl.u32 %v579, 7
  %v581 = vsub.s32 0, %v580
  %v582 = vrot.slane %v567, %v581
  %v583 = vlaneseq
  %v584 = vshrl.u32 %v583, 7
  %v585 = vsub.s32 0, %v584
  %v586 = vrot.slane %v569, %v585
  %v587 = vlaneseq
  %v588 = vshrl.u32 %v587, 7
  %v589 = vsub.s32 0, %v588
  %v590 = vrot.slane %v552, %v589
  %v591 = vlaneseq
  %v592 = vshrl.u32 %v591, 7
  %v593 = vsub.s32 0, %v592
  %v594 = vrot.slane %v566, %v593
  %v595 = vlaneseq
  %v596 = vshrl.u32 %v595, 7
  %v597 = vsub.s32 0, %v596
  %v598 = vrot.slane %v568, %v597
  %v599 = vlaneseq
  %v600 = vshrl.u32 %v599, 7
  %v601 = vsub.s32 0, %v600
  %v602 = vrot.slane %v570, %v601
  %612 = vrot.lane.b32.xlu0 %v513, 96
  %v613 = vpop.permute.xlu0 %612
  %v615 = vadd.f32 %v574, %v613
  %v616 = vadd.f32 %v578, %v613
  %v617 = vadd.f32 %v582, %v613
  %v618 = vadd.f32 %v586, %v613
  %v619 = vadd.f32 %v590, %v613
  %v620 = vadd.f32 %v594, %v613
  %v621 = vadd.f32 %v598, %v613
  %v622 = vadd.f32 %v602, %v613
  %v623 = vmax.f32 %v615, 0.0
  %v624 = vmax.f32 %v616, 0.0
  %v625 = vmax.f32 %v617, 0.0
  %v626 = vmax.f32 %v618, 0.0
  %v627 = vmax.f32 %v619, 0.0
  %v628 = vmax.f32 %v620, 0.0
  %v629 = vmax.f32 %v621, 0.0
  %v630 = vmax.f32 %v622, 0.0
  %v631 = vlaneseq
  %v632 = vshrl.u32 %v631, 7
  %v633 = vsub.s32 7, %v632
  %v634 = vrot.slane %v15, %v633
  %v635 = vmul.f32 %v623, %v634
  %v636 = vmul.f32 %v624, %v634
  %v637 = vmul.f32 %v625, %v634
  %v638 = vmul.f32 %v626, %v634
  %v639 = vmul.f32 %v627, %v634
  %v640 = vmul.f32 %v628, %v634
  %v641 = vmul.f32 %v629, %v634
  %v642 = vmul.f32 %v630, %v634
  %v643 = vsel %vm111, %v635, 0.0
  %644 = vadd.xlane.f32.xlu0 %v643
  %v645 = vpop.xlane.xlu0 %644
  %v646 = vsel %vm111, %v636, 0.0
  %647 = vadd.xlane.f32.xlu0 %v646
  %v648 = vpop.xlane.xlu0 %647
  %v649 = vsel %vm111, %v637, 0.0
  %650 = vadd.xlane.f32.xlu0 %v649
  %v651 = vpop.xlane.xlu0 %650
  %v652 = vsel %vm111, %v638, 0.0
  %653 = vadd.xlane.f32.xlu0 %v652
  %v654 = vpop.xlane.xlu0 %653
  %v655 = vsel %vm111, %v639, 0.0
  %656 = vadd.xlane.f32.xlu0 %v655
  %v657 = vpop.xlane.xlu0 %656
  %v658 = vsel %vm111, %v640, 0.0
  %659 = vadd.xlane.f32.xlu0 %v658
  %v660 = vpop.xlane.xlu0 %659
  %v661 = vsel %vm111, %v641, 0.0
  %662 = vadd.xlane.f32.xlu0 %v661
  %v663 = vpop.xlane.xlu0 %662
  %v664 = vsel %vm111, %v642, 0.0
  %665 = vadd.xlane.f32.xlu0 %v664
  %v666 = vpop.xlane.xlu0 %665
  %s668 = vtos %v16
  %v669 = vstv %s668
  %v671 = vadd.f32 %v645, %v669
  %v672 = vadd.f32 %v648, %v669
  %v673 = vadd.f32 %v651, %v669
  %v674 = vadd.f32 %v654, %v669
  %v675 = vadd.f32 %v657, %v669
  %v676 = vadd.f32 %v660, %v669
  %v677 = vadd.f32 %v663, %v669
  %v678 = vadd.f32 %v666, %v669
  %v679 = vld [vmem:[%s1] sm:$0xff]
  %v681 = vlaneseq
  %v682 = vshrl.u32 %v681, 7
  %v683 = vsub.s32 0, %v682
  %v684 = vrot.slane %v679, %v683
  %686 = vbcast.lane.b32.xlu0 %v684, 256
  %v687 = vpop.permute.xlu0 %686
  %v688 = vlaneseq
  %v689 = vshrl.u32 %v688, 7
  %v690 = vsub.s32 1, %v689
  %v691 = vrot.slane %v679, %v690
  %693 = vbcast.lane.b32.xlu0 %v691, 256
  %v694 = vpop.permute.xlu0 %693
  %v695 = vlaneseq
  %v696 = vshrl.u32 %v695, 7
  %v697 = vsub.s32 2, %v696
  %v698 = vrot.slane %v679, %v697
  %700 = vbcast.lane.b32.xlu0 %v698, 256
  %v701 = vpop.permute.xlu0 %700
  %v702 = vlaneseq
  %v703 = vshrl.u32 %v702, 7
  %v704 = vsub.s32 3, %v703
  %v705 = vrot.slane %v679, %v704
  %707 = vbcast.lane.b32.xlu0 %v705, 256
  %v708 = vpop.permute.xlu0 %707
  %v709 = vlaneseq
  %v710 = vshrl.u32 %v709, 7
  %v711 = vsub.s32 4, %v710
  %v712 = vrot.slane %v679, %v711
  %714 = vbcast.lane.b32.xlu0 %v712, 256
  %v715 = vpop.permute.xlu0 %714
  %v716 = vlaneseq
  %v717 = vshrl.u32 %v716, 7
  %v718 = vsub.s32 5, %v717
  %v719 = vrot.slane %v679, %v718
  %721 = vbcast.lane.b32.xlu0 %v719, 256
  %v722 = vpop.permute.xlu0 %721
  %v723 = vlaneseq
  %v724 = vshrl.u32 %v723, 7
  %v725 = vsub.s32 6, %v724
  %v726 = vrot.slane %v679, %v725
  %728 = vbcast.lane.b32.xlu0 %v726, 256
  %v729 = vpop.permute.xlu0 %728
  %v730 = vlaneseq
  %v731 = vshrl.u32 %v730, 7
  %v732 = vsub.s32 7, %v731
  %v733 = vrot.slane %v679, %v732
  %735 = vbcast.lane.b32.xlu0 %v733, 256
  %v736 = vpop.permute.xlu0 %735
  %v745 = vadd.f32 %v671, %v687
  %v746 = vadd.f32 %v672, %v694
  %v747 = vadd.f32 %v673, %v701
  %v748 = vadd.f32 %v674, %v708
  %v749 = vadd.f32 %v675, %v715
  %v750 = vadd.f32 %v676, %v722
  %v751 = vadd.f32 %v677, %v729
  %v752 = vadd.f32 %v678, %v736
  %vm753 = vcmp.gt.f32.partialorder %v745, 0.0
  %vm754 = vcmp.gt.f32.partialorder %v746, 0.0
  %vm755 = vcmp.gt.f32.partialorder %v747, 0.0
  %vm756 = vcmp.gt.f32.partialorder %v748, 0.0
  %vm757 = vcmp.gt.f32.partialorder %v749, 0.0
  %vm758 = vcmp.gt.f32.partialorder %v750, 0.0
  %vm759 = vcmp.gt.f32.partialorder %v751, 0.0
  %vm760 = vcmp.gt.f32.partialorder %v752, 0.0
  %v761 = vsel %vm753, 1, 0
  %v762 = vsel %vm754, 1, 0
  %v763 = vsel %vm755, 1, 0
  %v764 = vsel %vm756, 1, 0
  %v765 = vsel %vm757, 1, 0
  %v766 = vsel %vm758, 1, 0
  %v767 = vsel %vm759, 1, 0
  %v768 = vsel %vm760, 1, 0
  %v769 = vcvt.s32.f32 %v761
  %v770 = vcvt.s32.f32 %v762
  %v771 = vcvt.s32.f32 %v763
  %v772 = vcvt.s32.f32 %v764
  %v773 = vcvt.s32.f32 %v765
  %v774 = vcvt.s32.f32 %v766
  %v775 = vcvt.s32.f32 %v767
  %v776 = vcvt.s32.f32 %v768
  %v777 = vlaneseq
  %v778 = vshrl.u32 %v777, 7
  %v779 = vsub.s32 1, %v778
  %v780 = vrot.slane %v16, %v779
  %782 = vrot.lane.b32.xlu0 %v780, 16
  %v783 = vpop.permute.xlu0 %782
  %v785 = vmul.f32 %v259, %v783
  %787 = vrot.lane.b32.xlu0 %v785, 112
  %v788 = vpop.permute.xlu0 %787
  %vm790 = vcmask 195584
  %v791 = vsel %vm790, %v788, 0.0
  %792 = vadd.xlane.f32.xlu0 %v791
  %v793 = vpop.xlane.xlu0 %792
  %v794 = vrot.slane %v16, 2
  %795 = vrot.lane.b32.xlu0 %v259, 112
  %v796 = vpop.permute.xlu0 %795
  %v797 = vsel %vm790, %v794, 0
  %v799 = vsel %vm790, %v796, 0
  %801 = vmatprep.subr.mxu0 0.0
  %802 = vmatpush1.xpose.msra.mxu0 %v799
  %803 = vmatprep.subr.mxu0 0.0
  %804 = vmatpush1.xpose.msra.mxu0 0.0
  %805 = vmatprep.subr.mxu0 0.0
  %806 = vmatpush1.xpose.msra.mxu0 0.0
  %807 = vmatprep.subr.mxu0 0.0
  %808 = vmatpush1.xpose.msra.mxu0 0.0
  %809 = vmatprep.subr.mxu0 0.0
  %810 = vmatpush1.xpose.msra.mxu0 0.0
  %811 = vmatprep.subr.mxu0 0.0
  %812 = vmatpush1.xpose.msra.mxu0 0.0
  %813 = vmatprep.subr.mxu0 0.0
  %814 = vmatpush1.xpose.msra.mxu0 0.0
  %815 = vmatprep.subr.mxu0 0.0
  %816 = vmatpush1.xpose.msra.mxu0 0.0
  %817 = vmatprep.subr.mxu0 0.0
  %818 = vmatpush1.xpose.msra.mxu0 0.0
  %819 = vmatprep.subr.mxu0 0.0
  %820 = vmatpush1.xpose.msra.mxu0 0.0
  %821 = vmatprep.subr.mxu0 0.0
  %822 = vmatpush1.xpose.msra.mxu0 0.0
  %823 = vmatprep.subr.mxu0 0.0
  %824 = vmatpush1.xpose.msra.mxu0 0.0
  %825 = vmatprep.subr.mxu0 0.0
  %826 = vmatpush1.xpose.msra.mxu0 0.0
  %827 = vmatprep.subr.mxu0 0.0
  %828 = vmatpush1.xpose.msra.mxu0 0.0
  %829 = vmatprep.subr.mxu0 0.0
  %830 = vmatpush1.xpose.msra.mxu0 0.0
  %831 = vmatprep.subr.mxu0 0.0
  %832 = vmatpush1.xpose.msra.mxu0 0.0
  %833 = vmatprep.subr.mxu0 0.0
  %834 = vmatpush1.xpose.msra.mxu0 0.0
  %835 = vmatprep.subr.mxu0 0.0
  %836 = vmatpush1.xpose.msra.mxu0 0.0
  %837 = vmatprep.subr.mxu0 0.0
  %838 = vmatpush1.xpose.msra.mxu0 0.0
  %839 = vmatprep.subr.mxu0 0.0
  %840 = vmatpush1.xpose.msra.mxu0 0.0
  %841 = vmatprep.subr.mxu0 0.0
  %842 = vmatpush1.xpose.msra.mxu0 0.0
  %843 = vmatprep.subr.mxu0 0.0
  %844 = vmatpush1.xpose.msra.mxu0 0.0
  %845 = vmatprep.subr.mxu0 0.0
  %846 = vmatpush1.xpose.msra.mxu0 0.0
  %847 = vmatprep.subr.mxu0 0.0
  %848 = vmatpush1.xpose.msra.mxu0 0.0
  %849 = vmatprep.subr.mxu0 0.0
  %850 = vmatpush1.xpose.msra.mxu0 0.0
  %851 = vmatprep.subr.mxu0 0.0
  %852 = vmatpush1.xpose.msra.mxu0 0.0
  %853 = vmatprep.subr.mxu0 0.0
  %854 = vmatpush1.xpose.msra.mxu0 0.0
  %855 = vmatprep.subr.mxu0 0.0
  %856 = vmatpush1.xpose.msra.mxu0 0.0
  %857 = vmatprep.subr.mxu0 0.0
  %858 = vmatpush1.xpose.msra.mxu0 0.0
  %859 = vmatprep.subr.mxu0 0.0
  %860 = vmatpush1.xpose.msra.mxu0 0.0
  %861 = vmatprep.subr.mxu0 0.0
  %862 = vmatpush1.xpose.msra.mxu0 0.0
  %863 = vmatprep.subr.mxu0 0.0
  %864 = vmatpush1.xpose.msra.mxu0 0.0
  %865 = vmatprep.mubr.f32.mxu0 0.0
  %866 = vmatmul.mubr.f32.gmra.mrb[0].mxu0 %v797
  %v867 = vpop.f32.mrb[0].mxu0
  %v868 = vadd.f32 0.0, %v867
  %v869 = vpop.f32.mrb[0].mxu0
  %870 = vdwg.mxu0
  %v871 = vlaneseq
  %v872 = vshrl.u32 %v871, 7
  %v873 = vsub.s32 0, %v872
  %v874 = vrot.slane %v868, %v873
  %v875 = vadd.f32 %v793, %v874
  %vm876 = vcmp.gt.f32.partialorder %v875, 0.0
  %v877 = vmul.f32 %v875, 0.2
  %v878 = vsel %vm876, %v875, %v877
  %vm879 = vcmp.gt.f32.partialorder %v769, 0.0
  %vm880 = vcmp.gt.f32.partialorder %v770, 0.0
  %vm881 = vcmp.gt.f32.partialorder %v771, 0.0
  %vm882 = vcmp.gt.f32.partialorder %v772, 0.0
  %vm883 = vcmp.gt.f32.partialorder %v773, 0.0
  %vm884 = vcmp.gt.f32.partialorder %v774, 0.0
  %vm885 = vcmp.gt.f32.partialorder %v775, 0.0
  %vm886 = vcmp.gt.f32.partialorder %v776, 0.0
  %v888 = vlaneseq
  %v889 = vshrl.u32 %v888, 7
  %v890 = vsub.s32 0, %v889
  %v891 = vrot.slane %v878, %v890
  %893 = vbcast.lane.b32.xlu0 %v891, 256
  %v894 = vpop.permute.xlu0 %893
  %v895 = vlaneseq
  %v896 = vshrl.u32 %v895, 7
  %v897 = vsub.s32 1, %v896
  %v898 = vrot.slane %v878, %v897
  %900 = vbcast.lane.b32.xlu0 %v898, 256
  %v901 = vpop.permute.xlu0 %900
  %v902 = vlaneseq
  %v903 = vshrl.u32 %v902, 7
  %v904 = vsub.s32 2, %v903
  %v905 = vrot.slane %v878, %v904
  %907 = vbcast.lane.b32.xlu0 %v905, 256
  %v908 = vpop.permute.xlu0 %907
  %v909 = vlaneseq
  %v910 = vshrl.u32 %v909, 7
  %v911 = vsub.s32 3, %v910
  %v912 = vrot.slane %v878, %v911
  %914 = vbcast.lane.b32.xlu0 %v912, 256
  %v915 = vpop.permute.xlu0 %914
  %v916 = vlaneseq
  %v917 = vshrl.u32 %v916, 7
  %v918 = vsub.s32 4, %v917
  %v919 = vrot.slane %v878, %v918
  %921 = vbcast.lane.b32.xlu0 %v919, 256
  %v922 = vpop.permute.xlu0 %921
  %v923 = vlaneseq
  %v924 = vshrl.u32 %v923, 7
  %v925 = vsub.s32 5, %v924
  %v926 = vrot.slane %v878, %v925
  %928 = vbcast.lane.b32.xlu0 %v926, 256
  %v929 = vpop.permute.xlu0 %928
  %v930 = vlaneseq
  %v931 = vshrl.u32 %v930, 7
  %v932 = vsub.s32 6, %v931
  %v933 = vrot.slane %v878, %v932
  %935 = vbcast.lane.b32.xlu0 %v933, 256
  %v936 = vpop.permute.xlu0 %935
  %v937 = vlaneseq
  %v938 = vshrl.u32 %v937, 7
  %v939 = vsub.s32 7, %v938
  %v940 = vrot.slane %v878, %v939
  %942 = vbcast.lane.b32.xlu0 %v940, 256
  %v943 = vpop.permute.xlu0 %942
  %v952 = vsel %vm879, %v894, -1e+09
  %v953 = vsel %vm880, %v901, -1e+09
  %v954 = vsel %vm881, %v908, -1e+09
  %v955 = vsel %vm882, %v915, -1e+09
  %v956 = vsel %vm883, %v922, -1e+09
  %v957 = vsel %vm884, %v929, -1e+09
  %v958 = vsel %vm885, %v936, -1e+09
  %v959 = vsel %vm886, %v943, -1e+09
  %968 = vset.pattern.permute.xlu0 0
  %969 = vperm.xlu0 %968, %v952
  %v970 = vpop.permute.xlu0 %969
  %971 = vset.pattern.permute.xlu0 0
  %972 = vperm.xlu0 %971, %v953
  %v973 = vpop.permute.xlu0 %972
  %974 = vset.pattern.permute.xlu0 0
  %975 = vperm.xlu0 %974, %v954
  %v976 = vpop.permute.xlu0 %975
  %977 = vset.pattern.permute.xlu0 0
  %978 = vperm.xlu0 %977, %v955
  %v979 = vpop.permute.xlu0 %978
  %980 = vset.pattern.permute.xlu0 0
  %981 = vperm.xlu0 %980, %v956
  %v982 = vpop.permute.xlu0 %981
  %983 = vset.pattern.permute.xlu0 0
  %984 = vperm.xlu0 %983, %v957
  %v985 = vpop.permute.xlu0 %984
  %986 = vset.pattern.permute.xlu0 0
  %987 = vperm.xlu0 %986, %v958
  %v988 = vpop.permute.xlu0 %987
  %989 = vset.pattern.permute.xlu0 0
  %990 = vperm.xlu0 %989, %v959
  %v991 = vpop.permute.xlu0 %990
  %v992 = vlaneseq
  %v993 = vand.u32 %v992, 127
  %v994 = vlaneseq
  %v995 = vshrl.u32 %v994, 7
  %v996 = vsub.s32 %v993, %v995
  %v997 = vrot.slane %v970, %v996
  %v998 = vlaneseq
  %v999 = vshrl.u32 %v998, 7
  %v1000 = vsub.s32 %v993, %v999
  %v1001 = vrot.slane %v973, %v1000
  %v1002 = vlaneseq
  %v1003 = vshrl.u32 %v1002, 7
  %v1004 = vsub.s32 %v993, %v1003
  %v1005 = vrot.slane %v976, %v1004
  %v1006 = vlaneseq
  %v1007 = vshrl.u32 %v1006, 7
  %v1008 = vsub.s32 %v993, %v1007
  %v1009 = vrot.slane %v979, %v1008
  %v1010 = vlaneseq
  %v1011 = vshrl.u32 %v1010, 7
  %v1012 = vsub.s32 %v993, %v1011
  %v1013 = vrot.slane %v982, %v1012
  %v1014 = vlaneseq
  %v1015 = vshrl.u32 %v1014, 7
  %v1016 = vsub.s32 %v993, %v1015
  %v1017 = vrot.slane %v985, %v1016
  %v1018 = vlaneseq
  %v1019 = vshrl.u32 %v1018, 7
  %v1020 = vsub.s32 %v993, %v1019
  %v1021 = vrot.slane %v988, %v1020
  %v1022 = vlaneseq
  %v1023 = vshrl.u32 %v1022, 7
  %v1024 = vsub.s32 %v993, %v1023
  %v1025 = vrot.slane %v991, %v1024
  %vm1026 = vcmask 1041409
  %v1027 = vsel %vm1026, %v1001, %v997
  %vm1028 = vcmask 1042434
  %v1029 = vsel %vm1028, %v1005, %v1027
  %vm1030 = vcmask 1043459
  %v1031 = vsel %vm1030, %v1009, %v1029
  %vm1032 = vcmask 1044484
  %v1033 = vsel %vm1032, %v1013, %v1031
  %vm1034 = vcmask 1045509
  %v1035 = vsel %vm1034, %v1017, %v1033
  %vm1036 = vcmask 1046534
  %v1037 = vsel %vm1036, %v1021, %v1035
  %vm1038 = vcmask 1047559
  %v1039 = vsel %vm1038, %v1025, %v1037
  %v1041 = vsel %vm356, %v1039, -inf
  %1042 = vmax.xlane.f32.xlu0 %v1041
  %v1043 = vpop.xlane.xlu0 %1042
  %v1045 = vlaneseq
  %v1046 = vshrl.u32 %v1045, 7
  %v1047 = vsub.s32 0, %v1046
  %v1048 = vrot.slane %v1043, %v1047
  %v1049 = vlaneseq
  %v1050 = vshrl.u32 %v1049, 7
  %v1051 = vsub.s32 1, %v1050
  %v1052 = vrot.slane %v1043, %v1051
  %v1053 = vlaneseq
  %v1054 = vshrl.u32 %v1053, 7
  %v1055 = vsub.s32 2, %v1054
  %v1056 = vrot.slane %v1043, %v1055
  %v1057 = vlaneseq
  %v1058 = vshrl.u32 %v1057, 7
  %v1059 = vsub.s32 3, %v1058
  %v1060 = vrot.slane %v1043, %v1059
  %v1061 = vlaneseq
  %v1062 = vshrl.u32 %v1061, 7
  %v1063 = vsub.s32 4, %v1062
  %v1064 = vrot.slane %v1043, %v1063
  %v1065 = vlaneseq
  %v1066 = vshrl.u32 %v1065, 7
  %v1067 = vsub.s32 5, %v1066
  %v1068 = vrot.slane %v1043, %v1067
  %v1069 = vlaneseq
  %v1070 = vshrl.u32 %v1069, 7
  %v1071 = vsub.s32 6, %v1070
  %v1072 = vrot.slane %v1043, %v1071
  %v1073 = vlaneseq
  %v1074 = vshrl.u32 %v1073, 7
  %v1075 = vsub.s32 7, %v1074
  %v1076 = vrot.slane %v1043, %v1075
  %v1085 = vsub.f32 %v952, %v1048
  %v1086 = vsub.f32 %v953, %v1052
  %v1087 = vsub.f32 %v954, %v1056
  %v1088 = vsub.f32 %v955, %v1060
  %v1089 = vsub.f32 %v956, %v1064
  %v1090 = vsub.f32 %v957, %v1068
  %v1091 = vsub.f32 %v958, %v1072
  %v1092 = vsub.f32 %v959, %v1076
  %v1093 = vmul.f32 %v1085, 1.442695
  %v1094 = vpow.pop %v1093
  %v1095 = vmul.f32 %v1086, 1.442695
  %v1096 = vpow.pop %v1095
  %v1097 = vmul.f32 %v1087, 1.442695
  %v1098 = vpow.pop %v1097
  %v1099 = vmul.f32 %v1088, 1.442695
  %v1100 = vpow.pop %v1099
  %v1101 = vmul.f32 %v1089, 1.442695
  %v1102 = vpow.pop %v1101
  %v1103 = vmul.f32 %v1090, 1.442695
  %v1104 = vpow.pop %v1103
  %v1105 = vmul.f32 %v1091, 1.442695
  %v1106 = vpow.pop %v1105
  %v1107 = vmul.f32 %v1092, 1.442695
  %v1108 = vpow.pop %v1107
  %v1109 = vsel %vm879, %v1094, 0.0
  %v1110 = vsel %vm880, %v1096, 0.0
  %v1111 = vsel %vm881, %v1098, 0.0
  %v1112 = vsel %vm882, %v1100, 0.0
  %v1113 = vsel %vm883, %v1102, 0.0
  %v1114 = vsel %vm884, %v1104, 0.0
  %v1115 = vsel %vm885, %v1106, 0.0
  %v1116 = vsel %vm886, %v1108, 0.0
  %1125 = vset.pattern.permute.xlu0 0
  %1126 = vperm.xlu0 %1125, %v1109
  %v1127 = vpop.permute.xlu0 %1126
  %1128 = vset.pattern.permute.xlu0 0
  %1129 = vperm.xlu0 %1128, %v1110
  %v1130 = vpop.permute.xlu0 %1129
  %1131 = vset.pattern.permute.xlu0 0
  %1132 = vperm.xlu0 %1131, %v1111
  %v1133 = vpop.permute.xlu0 %1132
  %1134 = vset.pattern.permute.xlu0 0
  %1135 = vperm.xlu0 %1134, %v1112
  %v1136 = vpop.permute.xlu0 %1135
  %1137 = vset.pattern.permute.xlu0 0
  %1138 = vperm.xlu0 %1137, %v1113
  %v1139 = vpop.permute.xlu0 %1138
  %1140 = vset.pattern.permute.xlu0 0
  %1141 = vperm.xlu0 %1140, %v1114
  %v1142 = vpop.permute.xlu0 %1141
  %1143 = vset.pattern.permute.xlu0 0
  %1144 = vperm.xlu0 %1143, %v1115
  %v1145 = vpop.permute.xlu0 %1144
  %1146 = vset.pattern.permute.xlu0 0
  %1147 = vperm.xlu0 %1146, %v1116
  %v1148 = vpop.permute.xlu0 %1147
  %v1149 = vlaneseq
  %v1150 = vshrl.u32 %v1149, 7
  %v1151 = vsub.s32 %v993, %v1150
  %v1152 = vrot.slane %v1127, %v1151
  %v1153 = vlaneseq
  %v1154 = vshrl.u32 %v1153, 7
  %v1155 = vsub.s32 %v993, %v1154
  %v1156 = vrot.slane %v1130, %v1155
  %v1157 = vlaneseq
  %v1158 = vshrl.u32 %v1157, 7
  %v1159 = vsub.s32 %v993, %v1158
  %v1160 = vrot.slane %v1133, %v1159
  %v1161 = vlaneseq
  %v1162 = vshrl.u32 %v1161, 7
  %v1163 = vsub.s32 %v993, %v1162
  %v1164 = vrot.slane %v1136, %v1163
  %v1165 = vlaneseq
  %v1166 = vshrl.u32 %v1165, 7
  %v1167 = vsub.s32 %v993, %v1166
  %v1168 = vrot.slane %v1139, %v1167
  %v1169 = vlaneseq
  %v1170 = vshrl.u32 %v1169, 7
  %v1171 = vsub.s32 %v993, %v1170
  %v1172 = vrot.slane %v1142, %v1171
  %v1173 = vlaneseq
  %v1174 = vshrl.u32 %v1173, 7
  %v1175 = vsub.s32 %v993, %v1174
  %v1176 = vrot.slane %v1145, %v1175
  %v1177 = vlaneseq
  %v1178 = vshrl.u32 %v1177, 7
  %v1179 = vsub.s32 %v993, %v1178
  %v1180 = vrot.slane %v1148, %v1179
  %v1181 = vsel %vm1026, %v1156, %v1152
  %v1182 = vsel %vm1028, %v1160, %v1181
  %v1183 = vsel %vm1030, %v1164, %v1182
  %v1184 = vsel %vm1032, %v1168, %v1183
  %v1185 = vsel %vm1034, %v1172, %v1184
  %v1186 = vsel %vm1036, %v1176, %v1185
  %v1187 = vsel %vm1038, %v1180, %v1186
  %v1189 = vsel %vm356, %v1187, 0.0
  %1190 = vadd.xlane.f32.xlu0 %v1189
  %v1191 = vpop.xlane.xlu0 %1190
  %v1192 = vmax.f32 %v1191, 1e-20
  %v1194 = vlaneseq
  %v1195 = vshrl.u32 %v1194, 7
  %v1196 = vsub.s32 0, %v1195
  %v1197 = vrot.slane %v1192, %v1196
  %v1198 = vlaneseq
  %v1199 = vshrl.u32 %v1198, 7
  %v1200 = vsub.s32 1, %v1199
  %v1201 = vrot.slane %v1192, %v1200
  %v1202 = vlaneseq
  %v1203 = vshrl.u32 %v1202, 7
  %v1204 = vsub.s32 2, %v1203
  %v1205 = vrot.slane %v1192, %v1204
  %v1206 = vlaneseq
  %v1207 = vshrl.u32 %v1206, 7
  %v1208 = vsub.s32 3, %v1207
  %v1209 = vrot.slane %v1192, %v1208
  %v1210 = vlaneseq
  %v1211 = vshrl.u32 %v1210, 7
  %v1212 = vsub.s32 4, %v1211
  %v1213 = vrot.slane %v1192, %v1212
  %v1214 = vlaneseq
  %v1215 = vshrl.u32 %v1214, 7
  %v1216 = vsub.s32 5, %v1215
  %v1217 = vrot.slane %v1192, %v1216
  %v1218 = vlaneseq
  %v1219 = vshrl.u32 %v1218, 7
  %v1220 = vsub.s32 6, %v1219
  %v1221 = vrot.slane %v1192, %v1220
  %v1222 = vlaneseq
  %v1223 = vshrl.u32 %v1222, 7
  %v1224 = vsub.s32 7, %v1223
  %v1225 = vrot.slane %v1192, %v1224
  %v1234 = vrcp.pop %v1197
  %v1235 = vmul.f32 %v1109, %v1234
  %v1236 = vrcp.pop %v1201
  %v1237 = vmul.f32 %v1110, %v1236
  %v1238 = vrcp.pop %v1205
  %v1239 = vmul.f32 %v1111, %v1238
  %v1240 = vrcp.pop %v1209
  %v1241 = vmul.f32 %v1112, %v1240
  %v1242 = vrcp.pop %v1213
  %v1243 = vmul.f32 %v1113, %v1242
  %v1244 = vrcp.pop %v1217
  %v1245 = vmul.f32 %v1114, %v1244
  %v1246 = vrcp.pop %v1221
  %v1247 = vmul.f32 %v1115, %v1246
  %v1248 = vrcp.pop %v1225
  %v1249 = vmul.f32 %v1116, %v1248
  %1258 = vset.pattern.permute.xlu0 0
  %1259 = vperm.xlu0 %1258, %v1235
  %v1260 = vpop.permute.xlu0 %1259
  %1261 = vset.pattern.permute.xlu0 0
  %1262 = vperm.xlu0 %1261, %v1237
  %v1263 = vpop.permute.xlu0 %1262
  %1264 = vset.pattern.permute.xlu0 0
  %1265 = vperm.xlu0 %1264, %v1239
  %v1266 = vpop.permute.xlu0 %1265
  %1267 = vset.pattern.permute.xlu0 0
  %1268 = vperm.xlu0 %1267, %v1241
  %v1269 = vpop.permute.xlu0 %1268
  %1270 = vset.pattern.permute.xlu0 0
  %1271 = vperm.xlu0 %1270, %v1243
  %v1272 = vpop.permute.xlu0 %1271
  %1273 = vset.pattern.permute.xlu0 0
  %1274 = vperm.xlu0 %1273, %v1245
  %v1275 = vpop.permute.xlu0 %1274
  %1276 = vset.pattern.permute.xlu0 0
  %1277 = vperm.xlu0 %1276, %v1247
  %v1278 = vpop.permute.xlu0 %1277
  %1279 = vset.pattern.permute.xlu0 0
  %1280 = vperm.xlu0 %1279, %v1249
  %v1281 = vpop.permute.xlu0 %1280
  %v1282 = vlaneseq
  %v1283 = vshrl.u32 %v1282, 7
  %v1284 = vsub.s32 %v993, %v1283
  %v1285 = vrot.slane %v1260, %v1284
  %v1286 = vlaneseq
  %v1287 = vshrl.u32 %v1286, 7
  %v1288 = vsub.s32 %v993, %v1287
  %v1289 = vrot.slane %v1263, %v1288
  %v1290 = vlaneseq
  %v1291 = vshrl.u32 %v1290, 7
  %v1292 = vsub.s32 %v993, %v1291
  %v1293 = vrot.slane %v1266, %v1292
  %v1294 = vlaneseq
  %v1295 = vshrl.u32 %v1294, 7
  %v1296 = vsub.s32 %v993, %v1295
  %v1297 = vrot.slane %v1269, %v1296
  %v1298 = vlaneseq
  %v1299 = vshrl.u32 %v1298, 7
  %v1300 = vsub.s32 %v993, %v1299
  %v1301 = vrot.slane %v1272, %v1300
  %v1302 = vlaneseq
  %v1303 = vshrl.u32 %v1302, 7
  %v1304 = vsub.s32 %v993, %v1303
  %v1305 = vrot.slane %v1275, %v1304
  %v1306 = vlaneseq
  %v1307 = vshrl.u32 %v1306, 7
  %v1308 = vsub.s32 %v993, %v1307
  %v1309 = vrot.slane %v1278, %v1308
  %v1310 = vlaneseq
  %v1311 = vshrl.u32 %v1310, 7
  %v1312 = vsub.s32 %v993, %v1311
  %v1313 = vrot.slane %v1281, %v1312
  %v1314 = vsel %vm1026, %v1289, %v1285
  %v1315 = vsel %vm1028, %v1293, %v1314
  %v1316 = vsel %vm1030, %v1297, %v1315
  %v1317 = vsel %vm1032, %v1301, %v1316
  %v1318 = vsel %vm1034, %v1305, %v1317
  %v1319 = vsel %vm1036, %v1309, %v1318
  %v1320 = vsel %vm1038, %v1313, %v1319
  %v1322 = vsel %vm356, %v1320, 0
  %1324 = vmatprep.subr.mxu0 0.0
  %1325 = vmatpush1.msra.mxu0 %v796
  %1326 = vmatprep.subr.mxu0 0.0
  %1327 = vmatpush1.msra.mxu0 0.0
  %1328 = vmatprep.subr.mxu0 0.0
  %1329 = vmatpush1.msra.mxu0 0.0
  %1330 = vmatprep.subr.mxu0 0.0
  %1331 = vmatpush1.msra.mxu0 0.0
  %1332 = vmatprep.subr.mxu0 0.0
  %1333 = vmatpush1.msra.mxu0 0.0
  %1334 = vmatprep.subr.mxu0 0.0
  %1335 = vmatpush1.msra.mxu0 0.0
  %1336 = vmatprep.subr.mxu0 0.0
  %1337 = vmatpush1.msra.mxu0 0.0
  %1338 = vmatprep.subr.mxu0 0.0
  %1339 = vmatpush1.msra.mxu0 0.0
  %1340 = vmatprep.subr.mxu0 0.0
  %1341 = vmatpush1.msra.mxu0 0.0
  %1342 = vmatprep.subr.mxu0 0.0
  %1343 = vmatpush1.msra.mxu0 0.0
  %1344 = vmatprep.subr.mxu0 0.0
  %1345 = vmatpush1.msra.mxu0 0.0
  %1346 = vmatprep.subr.mxu0 0.0
  %1347 = vmatpush1.msra.mxu0 0.0
  %1348 = vmatprep.subr.mxu0 0.0
  %1349 = vmatpush1.msra.mxu0 0.0
  %1350 = vmatprep.subr.mxu0 0.0
  %1351 = vmatpush1.msra.mxu0 0.0
  %1352 = vmatprep.subr.mxu0 0.0
  %1353 = vmatpush1.msra.mxu0 0.0
  %1354 = vmatprep.subr.mxu0 0.0
  %1355 = vmatpush1.msra.mxu0 0.0
  %1356 = vmatprep.subr.mxu0 0.0
  %1357 = vmatpush1.msra.mxu0 0.0
  %1358 = vmatprep.subr.mxu0 0.0
  %1359 = vmatpush1.msra.mxu0 0.0
  %1360 = vmatprep.subr.mxu0 0.0
  %1361 = vmatpush1.msra.mxu0 0.0
  %1362 = vmatprep.subr.mxu0 0.0
  %1363 = vmatpush1.msra.mxu0 0.0
  %1364 = vmatprep.subr.mxu0 0.0
  %1365 = vmatpush1.msra.mxu0 0.0
  %1366 = vmatprep.subr.mxu0 0.0
  %1367 = vmatpush1.msra.mxu0 0.0
  %1368 = vmatprep.subr.mxu0 0.0
  %1369 = vmatpush1.msra.mxu0 0.0
  %1370 = vmatprep.subr.mxu0 0.0
  %1371 = vmatpush1.msra.mxu0 0.0
  %1372 = vmatprep.subr.mxu0 0.0
  %1373 = vmatpush1.msra.mxu0 0.0
  %1374 = vmatprep.subr.mxu0 0.0
  %1375 = vmatpush1.msra.mxu0 0.0
  %1376 = vmatprep.subr.mxu0 0.0
  %1377 = vmatpush1.msra.mxu0 0.0
  %1378 = vmatprep.subr.mxu0 0.0
  %1379 = vmatpush1.msra.mxu0 0.0
  %1380 = vmatprep.subr.mxu0 0.0
  %1381 = vmatpush1.msra.mxu0 0.0
  %1382 = vmatprep.subr.mxu0 0.0
  %1383 = vmatpush1.msra.mxu0 0.0
  %1384 = vmatprep.subr.mxu0 0.0
  %1385 = vmatpush1.msra.mxu0 0.0
  %1386 = vmatprep.subr.mxu0 0.0
  %1387 = vmatpush1.msra.mxu0 0.0
  %1388 = vmatprep.mubr.f32.mxu0 0.0
  %1389 = vmatmul.mubr.f32.gmra.mrb[0].mxu0 %v1322
  %v1390 = vpop.f32.mrb[0].mxu0
  %v1391 = vadd.f32 0.0, %v1390
  %v1392 = vpop.f32.mrb[0].mxu0
  %1393 = vdwg.mxu0
  %v1394 = vld [vmem:[%s2 + $0x68] sm:$0xff]
  %v1395 = vld [vmem:[%s2 + $0x70] sm:$0xff]
  %v1396 = vld [vmem:[%s2 + $0x78] sm:$0xff]
  %v1397 = vlaneseq
  %v1398 = vshrl.u32 %v1397, 7
  %v1399 = vsub.s32 3, %v1398
  %v1400 = vrot.slane %v15, %v1399
  %v1402 = vsel %vm790, %v1391, 0
  %1404 = vmatprep.subr.mxu0 0.0
  %1405 = vmatpush1.msra.mxu0 %v1394
  %1406 = vmatprep.subr.mxu0 0.0
  %1407 = vmatpush1.msra.mxu0 %v1395
  %1408 = vmatprep.subr.mxu0 0.0
  %1409 = vmatpush1.msra.mxu0 %v1396
  %1410 = vmatprep.subr.mxu0 0.0
  %1411 = vmatpush1.msra.mxu0 0.0
  %1412 = vmatprep.subr.mxu0 0.0
  %1413 = vmatpush1.msra.mxu0 0.0
  %1414 = vmatprep.subr.mxu0 0.0
  %1415 = vmatpush1.msra.mxu0 0.0
  %1416 = vmatprep.subr.mxu0 0.0
  %1417 = vmatpush1.msra.mxu0 0.0
  %1418 = vmatprep.subr.mxu0 0.0
  %1419 = vmatpush1.msra.mxu0 0.0
  %1420 = vmatprep.subr.mxu0 0.0
  %1421 = vmatpush1.msra.mxu0 0.0
  %1422 = vmatprep.subr.mxu0 0.0
  %1423 = vmatpush1.msra.mxu0 0.0
  %1424 = vmatprep.subr.mxu0 0.0
  %1425 = vmatpush1.msra.mxu0 0.0
  %1426 = vmatprep.subr.mxu0 0.0
  %1427 = vmatpush1.msra.mxu0 0.0
  %1428 = vmatprep.subr.mxu0 0.0
  %1429 = vmatpush1.msra.mxu0 0.0
  %1430 = vmatprep.subr.mxu0 0.0
  %1431 = vmatpush1.msra.mxu0 0.0
  %1432 = vmatprep.subr.mxu0 0.0
  %1433 = vmatpush1.msra.mxu0 0.0
  %1434 = vmatprep.subr.mxu0 0.0
  %1435 = vmatpush1.msra.mxu0 0.0
  %1436 = vmatprep.subr.mxu0 0.0
  %1437 = vmatpush1.msra.mxu0 0.0
  %1438 = vmatprep.subr.mxu0 0.0
  %1439 = vmatpush1.msra.mxu0 0.0
  %1440 = vmatprep.subr.mxu0 0.0
  %1441 = vmatpush1.msra.mxu0 0.0
  %1442 = vmatprep.subr.mxu0 0.0
  %1443 = vmatpush1.msra.mxu0 0.0
  %1444 = vmatprep.subr.mxu0 0.0
  %1445 = vmatpush1.msra.mxu0 0.0
  %1446 = vmatprep.subr.mxu0 0.0
  %1447 = vmatpush1.msra.mxu0 0.0
  %1448 = vmatprep.subr.mxu0 0.0
  %1449 = vmatpush1.msra.mxu0 0.0
  %1450 = vmatprep.subr.mxu0 0.0
  %1451 = vmatpush1.msra.mxu0 0.0
  %1452 = vmatprep.subr.mxu0 0.0
  %1453 = vmatpush1.msra.mxu0 0.0
  %1454 = vmatprep.subr.mxu0 0.0
  %1455 = vmatpush1.msra.mxu0 0.0
  %1456 = vmatprep.subr.mxu0 0.0
  %1457 = vmatpush1.msra.mxu0 0.0
  %1458 = vmatprep.subr.mxu0 0.0
  %1459 = vmatpush1.msra.mxu0 0.0
  %1460 = vmatprep.subr.mxu0 0.0
  %1461 = vmatpush1.msra.mxu0 0.0
  %1462 = vmatprep.subr.mxu0 0.0
  %1463 = vmatpush1.msra.mxu0 0.0
  %1464 = vmatprep.subr.mxu0 0.0
  %1465 = vmatpush1.msra.mxu0 0.0
  %1466 = vmatprep.subr.mxu0 0.0
  %1467 = vmatpush1.msra.mxu0 0.0
  %1468 = vmatprep.mubr.f32.mxu0 0.0
  %1469 = vmatmul.mubr.f32.gmra.mrb[0].mxu0 %v1402
  %v1470 = vpop.f32.mrb[0].mxu0
  %v1471 = vadd.f32 %v1400, %v1470
  %v1472 = vpop.f32.mrb[0].mxu0
  %1473 = vdwg.mxu0
  %v1474 = vmax.f32 %v1471, 0.0
  %v1475 = vld [vmem:[%s2 + $0x80] sm:$0xff]
  %v1476 = vld [vmem:[%s2 + $0x88] sm:$0xff]
  %v1477 = vld [vmem:[%s2 + $0x90] sm:$0xff]
  %v1478 = vld [vmem:[%s2 + $0x98] sm:$0xff]
  %v1479 = vlaneseq
  %v1480 = vshrl.u32 %v1479, 7
  %v1481 = vsub.s32 4, %v1480
  %v1482 = vrot.slane %v15, %v1481
  %v1484 = vsel %vm111, %v1474, 0
  %1486 = vmatprep.subr.mxu0 0.0
  %1487 = vmatpush1.msra.mxu0 %v1475
  %1488 = vmatprep.subr.mxu0 0.0
  %1489 = vmatpush1.msra.mxu0 %v1476
  %1490 = vmatprep.subr.mxu0 0.0
  %1491 = vmatpush1.msra.mxu0 %v1477
  %1492 = vmatprep.subr.mxu0 0.0
  %1493 = vmatpush1.msra.mxu0 %v1478
  %1494 = vmatprep.subr.mxu0 0.0
  %1495 = vmatpush1.msra.mxu0 0.0
  %1496 = vmatprep.subr.mxu0 0.0
  %1497 = vmatpush1.msra.mxu0 0.0
  %1498 = vmatprep.subr.mxu0 0.0
  %1499 = vmatpush1.msra.mxu0 0.0
  %1500 = vmatprep.subr.mxu0 0.0
  %1501 = vmatpush1.msra.mxu0 0.0
  %1502 = vmatprep.subr.mxu0 0.0
  %1503 = vmatpush1.msra.mxu0 0.0
  %1504 = vmatprep.subr.mxu0 0.0
  %1505 = vmatpush1.msra.mxu0 0.0
  %1506 = vmatprep.subr.mxu0 0.0
  %1507 = vmatpush1.msra.mxu0 0.0
  %1508 = vmatprep.subr.mxu0 0.0
  %1509 = vmatpush1.msra.mxu0 0.0
  %1510 = vmatprep.subr.mxu0 0.0
  %1511 = vmatpush1.msra.mxu0 0.0
  %1512 = vmatprep.subr.mxu0 0.0
  %1513 = vmatpush1.msra.mxu0 0.0
  %1514 = vmatprep.subr.mxu0 0.0
  %1515 = vmatpush1.msra.mxu0 0.0
  %1516 = vmatprep.subr.mxu0 0.0
  %1517 = vmatpush1.msra.mxu0 0.0
  %1518 = vmatprep.subr.mxu0 0.0
  %1519 = vmatpush1.msra.mxu0 0.0
  %1520 = vmatprep.subr.mxu0 0.0
  %1521 = vmatpush1.msra.mxu0 0.0
  %1522 = vmatprep.subr.mxu0 0.0
  %1523 = vmatpush1.msra.mxu0 0.0
  %1524 = vmatprep.subr.mxu0 0.0
  %1525 = vmatpush1.msra.mxu0 0.0
  %1526 = vmatprep.subr.mxu0 0.0
  %1527 = vmatpush1.msra.mxu0 0.0
  %1528 = vmatprep.subr.mxu0 0.0
  %1529 = vmatpush1.msra.mxu0 0.0
  %1530 = vmatprep.subr.mxu0 0.0
  %1531 = vmatpush1.msra.mxu0 0.0
  %1532 = vmatprep.subr.mxu0 0.0
  %1533 = vmatpush1.msra.mxu0 0.0
  %1534 = vmatprep.subr.mxu0 0.0
  %1535 = vmatpush1.msra.mxu0 0.0
  %1536 = vmatprep.subr.mxu0 0.0
  %1537 = vmatpush1.msra.mxu0 0.0
  %1538 = vmatprep.subr.mxu0 0.0
  %1539 = vmatpush1.msra.mxu0 0.0
  %1540 = vmatprep.subr.mxu0 0.0
  %1541 = vmatpush1.msra.mxu0 0.0
  %1542 = vmatprep.subr.mxu0 0.0
  %1543 = vmatpush1.msra.mxu0 0.0
  %1544 = vmatprep.subr.mxu0 0.0
  %1545 = vmatpush1.msra.mxu0 0.0
  %1546 = vmatprep.subr.mxu0 0.0
  %1547 = vmatpush1.msra.mxu0 0.0
  %1548 = vmatprep.subr.mxu0 0.0
  %1549 = vmatpush1.msra.mxu0 0.0
  %1550 = vmatprep.mubr.f32.mxu0 0.0
  %1551 = vmatmul.mubr.f32.gmra.mrb[0].mxu0 %v1484
  %v1552 = vpop.f32.mrb[0].mxu0
  %v1553 = vadd.f32 %v1482, %v1552
  %v1554 = vpop.f32.mrb[0].mxu0
  %1555 = vdwg.mxu0
  %1564 = vset.pattern.permute.xlu0 0
  %1565 = vperm.xlu0 %1564, %v769
  %v1566 = vpop.permute.xlu0 %1565
  %1567 = vset.pattern.permute.xlu0 0
  %1568 = vperm.xlu0 %1567, %v770
  %v1569 = vpop.permute.xlu0 %1568
  %1570 = vset.pattern.permute.xlu0 0
  %1571 = vperm.xlu0 %1570, %v771
  %v1572 = vpop.permute.xlu0 %1571
  %1573 = vset.pattern.permute.xlu0 0
  %1574 = vperm.xlu0 %1573, %v772
  %v1575 = vpop.permute.xlu0 %1574
  %1576 = vset.pattern.permute.xlu0 0
  %1577 = vperm.xlu0 %1576, %v773
  %v1578 = vpop.permute.xlu0 %1577
  %1579 = vset.pattern.permute.xlu0 0
  %1580 = vperm.xlu0 %1579, %v774
  %v1581 = vpop.permute.xlu0 %1580
  %1582 = vset.pattern.permute.xlu0 0
  %1583 = vperm.xlu0 %1582, %v775
  %v1584 = vpop.permute.xlu0 %1583
  %1585 = vset.pattern.permute.xlu0 0
  %1586 = vperm.xlu0 %1585, %v776
  %v1587 = vpop.permute.xlu0 %1586
  %v1588 = vadd.s32 %v993, 4294967280
  %v1589 = vlaneseq
  %v1590 = vshrl.u32 %v1589, 7
  %v1591 = vsub.s32 %v1588, %v1590
  %v1592 = vrot.slane %v1566, %v1591
  %v1593 = vlaneseq
  %v1594 = vshrl.u32 %v1593, 7
  %v1595 = vsub.s32 %v1588, %v1594
  %v1596 = vrot.slane %v1569, %v1595
  %v1597 = vlaneseq
  %v1598 = vshrl.u32 %v1597, 7
  %v1599 = vsub.s32 %v1588, %v1598
  %v1600 = vrot.slane %v1572, %v1599
  %v1601 = vlaneseq
  %v1602 = vshrl.u32 %v1601, 7
  %v1603 = vsub.s32 %v1588, %v1602
  %v1604 = vrot.slane %v1575, %v1603
  %v1605 = vlaneseq
  %v1606 = vshrl.u32 %v1605, 7
  %v1607 = vsub.s32 %v1588, %v1606
  %v1608 = vrot.slane %v1578, %v1607
  %v1609 = vlaneseq
  %v1610 = vshrl.u32 %v1609, 7
  %v1611 = vsub.s32 %v1588, %v1610
  %v1612 = vrot.slane %v1581, %v1611
  %v1613 = vlaneseq
  %v1614 = vshrl.u32 %v1613, 7
  %v1615 = vsub.s32 %v1588, %v1614
  %v1616 = vrot.slane %v1584, %v1615
  %v1617 = vlaneseq
  %v1618 = vshrl.u32 %v1617, 7
  %v1619 = vsub.s32 %v1588, %v1618
  %v1620 = vrot.slane %v1587, %v1619
  %v1621 = vsel %vm1026, %v1596, %v1592
  %v1622 = vsel %vm1028, %v1600, %v1621
  %v1623 = vsel %vm1030, %v1604, %v1622
  %v1624 = vsel %vm1032, %v1608, %v1623
  %v1625 = vsel %vm1034, %v1612, %v1624
  %v1626 = vsel %vm1036, %v1616, %v1625
  %v1627 = vsel %vm1038, %v1620, %v1626
  %v1629 = vsel %vm267, %v1553, %v1627
  %1630 = vst.msk [vmem:[%s3] sm:$0xff] %vm790, %v1629
  // Predicated region
  $region14: #{magic_forward.1} parent=0 // pred_check
    _
  $region15: #{magic_forward.1} parent=0 // pred_check_branch
    %1632 = sbr.rel (0) target = $region17
  $region16: #{magic_forward.1} parent=0 // pred_region
    _
  $region17: #{magic_forward.1} parent=0 // pred_fallthru
    _
  // Predicated region
  $region18: #{magic_forward.1} parent=0 // pred_check
    _
  $region19: #{magic_forward.1} parent=0 // pred_check_branch
    %1634 = sbr.rel (0) target = $region21
  $region20: #{magic_forward.1} parent=0 // pred_region
    _
  $region21: #{magic_forward.1} parent=0 // pred_fallthru
    _

</llo_original>
